<compile_context>
chip_gen: v6e
topology: v6e:2x2x1
jax: 0.10.0
libtpu: 0.0.40
codegen_flags: <defaults>
</compile_context>

<pallas_src>
import functools

import jax
import jax.numpy as jnp
import numpy as np
from jax import lax
from jax.experimental import pallas as pl
from jax.experimental.pallas import tpu as pltpu


# ----------------------------------------------------------------------------
# Kernel: one grid step processes a block of BE evidences.
# ----------------------------------------------------------------------------
def _verification_kernel(
    e_real_ref,   # SMEM  (1,)       int32  scalar-prefetch: # of real evidences
    ev_tok_ref,   # VMEM  (BE, L, H) bf16   evidence token embeddings
    poolw_ref,    # VMEM  (BE, L)    f32    mask * alpha-scale / mask-sum
    tijd_ref,     # VMEM  (BE, H)    f32    (1-alpha)*tijdAbsolute/number (or 0)
    wcomb_ref,    # VMEM  (H, NDP)   f32    [lw_ev@sel | wr_ev | zero-pad]
    base_ref,     # VMEM  (1, NDP)   f32    claim/meta partial scores + logit
    out_ref,      # VMEM  (1, NDP)   f32    lane-padded output distribution
    acc_ref,      # VMEM scratch (BE, NDP) f32
    *,
    be: int,
    ndp: int,
    nd: int,
):
    i = pl.program_id(0)

    @pl.when(i == 0)
    def _():
        acc_ref[...] = jnp.zeros_like(acc_ref)

    # masked mean pooling + time adjustment (denominator & alpha folded on host)
    tok = ev_tok_ref[...].astype(jnp.float32)                    # (BE, L, H)
    w = poolw_ref[...]                                           # (BE, L)
    enc = jnp.sum(tok * w[:, :, None], axis=1) + tijd_ref[...]   # (BE, H)

    # one MXU matmul: cols [0, nd) = domain label scores, col nd = rank logit
    full = jnp.dot(enc, wcomb_ref[...], preferred_element_type=jnp.float32)
    full = full + base_ref[...]                                  # (BE, NDP)

    # extract the rank-logit column and apply sigmoid (EUP reciprocal)
    col = lax.broadcasted_iota(jnp.int32, (1, ndp), 1)           # (1, NDP)
    logit = jnp.sum(jnp.where(col == nd, full, 0.0),
                    axis=-1, keepdims=True)                      # (BE, 1)
    rank = pl.reciprocal(1.0 + jnp.exp(-logit), approx=True)     # (BE, 1)

    # mask out padded evidences (rows beyond the real evidence count)
    row = lax.broadcasted_iota(jnp.int32, (be, 1), 0)            # (BE, 1)
    valid = (row + i * be < e_real_ref[0]).astype(jnp.float32)   # (BE, 1)

    acc_ref[...] += (valid * rank) * full

    @pl.when(i == pl.num_programs(0) - 1)
    def _():
        out_ref[...] = jnp.sum(acc_ref[...], axis=0, keepdims=True)


# ----------------------------------------------------------------------------
# Wrapper: host-side folding + pallas_call
# ----------------------------------------------------------------------------
def verification_forward(
    claim_tok, claim_mask, claim_tijd, claim_num,
    ev_tok, ev_mask, ev_tijd, ev_num,
    meta, wr, br, lw, sel, alpha,
    *, block_e: int = 8, ndp: int = 128,
):
    E, L, H = ev_tok.shape
    ND = sel.shape[1]
    assert ND + 1 <= ndp
    assert H % 128 == 0
    f32 = jnp.float32
    alpha = jnp.asarray(alpha, f32)

    # ---- claim encoding (tiny, loop-invariant): plain JAX ------------------
    c_pool = (claim_tok * claim_mask).sum(0) / jnp.maximum(claim_mask.sum(), 1e-9)
    cn = claim_num[0].astype(f32)
    c_adj = alpha * c_pool + (1.0 - alpha) * claim_tijd[0] / jnp.maximum(cn, 1.0)
    claim_enc = jnp.where(cn > 0.0, c_adj, c_pool)               # (H,)
    meta0 = meta[0]                                              # (H,)

    # ---- fold domain selection into label weights; append ranker column ----
    lw_dom = jnp.einsum('khn,nd->khd', lw, sel)                  # (3, H, ND)
    w_comb = jnp.zeros((H, ndp), f32)
    w_comb = w_comb.at[:, :ND].set(lw_dom[1])
    w_comb = w_comb.at[:, ND].set(wr[1])

    base_scores = claim_enc @ lw_dom[0] + meta0 @ lw_dom[2]      # (ND,)
    base_logit = wr[0] @ claim_enc + wr[2] @ meta0 + br[0, 0]
    base = jnp.zeros((1, ndp), f32)
    base = base.at[0, :ND].set(base_scores)
    base = base.at[0, ND].set(base_logit)

    # ---- per-evidence folding: pooling denom, alpha scale, time term -------
    m = ev_mask[:, :, 0]                                         # (E, L)
    msum = jnp.maximum(m.sum(axis=1, keepdims=True), 1e-9)       # (E, 1)
    n = ev_num.astype(f32)[:, None]                              # (E, 1)
    scale = jnp.where(n > 0.0, alpha, 1.0)                       # (E, 1)
    pool_w = m * (scale / msum)                                  # (E, L)
    tijd_adj = jnp.where(
        n > 0.0, (1.0 - alpha) * ev_tijd[:, 0, :] / jnp.maximum(n, 1.0), 0.0
    )                                                            # (E, H)

    # ---- pad evidences to a multiple of the evidence block -----------------
    E_pad = ((E + block_e - 1) // block_e) * block_e
    pad = E_pad - E
    ev_tok_p = jnp.pad(ev_tok, ((0, pad), (0, 0), (0, 0))).astype(jnp.bfloat16)
    pool_w_p = jnp.pad(pool_w, ((0, pad), (0, 0))).astype(f32)
    tijd_p = jnp.pad(tijd_adj, ((0, pad), (0, 0))).astype(f32)
    e_real = jnp.array([E], jnp.int32)

    kernel = functools.partial(_verification_kernel, be=block_e, ndp=ndp, nd=ND)

    grid_spec = pltpu.PrefetchScalarGridSpec(
        num_scalar_prefetch=1,
        grid=(E_pad // block_e,),
        in_specs=[
            pl.BlockSpec((block_e, L, H), lambda i, er: (i, 0, 0)),  # ev tokens
            pl.BlockSpec((block_e, L),    lambda i, er: (i, 0)),     # pool weights
            pl.BlockSpec((block_e, H),    lambda i, er: (i, 0)),     # time term
            pl.BlockSpec((H, ndp),        lambda i, er: (0, 0)),     # combined W
            pl.BlockSpec((1, ndp),        lambda i, er: (0, 0)),     # base row
        ],
        out_specs=pl.BlockSpec((1, ndp), lambda i, er: (0, 0)),
        scratch_shapes=[pltpu.VMEM((block_e, ndp), jnp.float32)],
    )

    out = pl.pallas_call(
        kernel,
        grid_spec=grid_spec,
        out_shape=jax.ShapeDtypeStruct((1, ndp), jnp.float32),
        compiler_params=pltpu.CompilerParams(
            dimension_semantics=("arbitrary",)),  # grid axis is a reduction
    )(e_real, ev_tok_p, pool_w_p, tijd_p, w_comb, base)
    return out[0, :ND]                                           # (ND,)


# ----------------------------------------------------------------------------
# Pure-JAX reference (mirrors the PyTorch forward semantics)
# ----------------------------------------------------------------------------
def reference_forward(
    claim_tok, claim_mask, claim_tijd, claim_num,
    ev_tok, ev_mask, ev_tijd, ev_num,
    meta, wr, br, lw, sel, alpha,
):
    def pool(tok, mask):
        return (tok * mask).sum(0) / jnp.maximum(mask.sum(), 1e-9)

    def adjust(enc, tijd, n):
        adj = alpha * enc + (1.0 - alpha) * tijd / jnp.maximum(n, 1.0)
        return jnp.where(n > 0, adj, enc)

    claim = adjust(pool(claim_tok, claim_mask), claim_tijd[0],
                   claim_num[0].astype(jnp.float32))
    meta0 = meta[0]
    dist = jnp.zeros((sel.shape[1],), jnp.float32)
    for i in range(ev_tok.shape[0]):
        ev = adjust(pool(ev_tok[i], ev_mask[i]), ev_tijd[i, 0],
                    ev_num[i].astype(jnp.float32))
        logit = wr[0] @ claim + wr[1] @ ev + wr[2] @ meta0 + br[0, 0]
        rank = 1.0 / (1.0 + jnp.exp(-logit))
        scores = claim @ lw[0] + ev @ lw[1] + meta0 @ lw[2]   # (NL,)
        dom = scores @ sel                                    # (ND,)
        dist = dist + rank * dom
    return dist


# ----------------------------------------------------------------------------
# Main
# ----------------------------------------------------------------------------
if __name__ == "__main__":
    L = 16          # max sequence length (<=512 in the module)
    H = 768         # hidden size (hard-coded in the module's embeddings)
    E = 3           # number of evidence snippets
    NL = 8          # total number of labels (labelEmbedding output)
    ND = 4          # labels in this domain (labelMaskDomain output)
    V_VERSCHIL = 86 # verschil embedding vocab (nn.Embedding(86, 768))
    ALPHA = 0.7

    key = jax.random.PRNGKey(0)
    ks = jax.random.split(key, 12)

    # --- synthetic "transformer" token embeddings + attention masks ---------
    claim_tok = jax.random.normal(ks[0], (L, H), jnp.float32) * 0.1
    claim_mask = (jnp.arange(L) < 10).astype(jnp.float32)[:, None]       # (L,1)

    ev_tok = jax.random.normal(ks[1], (E, L, H), jnp.float32) * 0.1
    ev_lens = np.array([16, 12, 7])
    ev_mask = (jnp.arange(L)[None, :] < jnp.asarray(ev_lens)[:, None])
    ev_mask = ev_mask.astype(jnp.float32)[:, :, None]                    # (E,L,1)

    # --- metadata encoding (output of the injected metadataEncoder) ---------
    meta = jax.random.normal(ks[2], (1, H), jnp.float32) * 0.1

    # --- "verschil" time-difference embedding table + host-side parsing -----
    verschil_table = jax.random.normal(ks[3], (V_VERSCHIL, H), jnp.float32) * 0.1

    # claim: forward() *overwrites* tijdAbsolute for the claim (=, not +=)
    # while still counting every valid index -> reproduce that exactly.
    claim_time_idx = np.array([3, 10])
    claim_tijd = verschil_table[claim_time_idx[-1]][None, :]             # (1, H)
    claim_num = jnp.array([len(claim_time_idx)], dtype=jnp.int32)

    # evidences: tijdAbsolute is accumulated (+=) over valid indices (<512).
    ev_time_idx = [[5], [], [1, 4, 7]]
    ev_tijd_rows, ev_num_rows = [], []
    for idxs in ev_time_idx:
        if len(idxs) > 0:
            ev_tijd_rows.append(verschil_table[jnp.asarray(idxs)].sum(0))
        else:
            ev_tijd_rows.append(jnp.zeros((H,), jnp.float32))
        ev_num_rows.append(len(idxs))
    ev_tijd = jnp.stack(ev_tijd_rows)[:, None, :]                        # (E,1,H)
    ev_num = jnp.asarray(ev_num_rows, dtype=jnp.int32)                   # (E,)

    # --- synthetic submodule parameters --------------------------------------
    # evidenceRanker: Linear(3H -> 1) + sigmoid, factored as 3 x (H,) blocks
    wr = jax.random.normal(ks[4], (3, H), jnp.float32) * 0.02
    br = jax.random.normal(ks[5], (1, 1), jnp.float32) * 0.02
    # labelEmbedding: Linear(3H -> NL), factored as 3 x (H, NL) blocks
    lw = jax.random.normal(ks[6], (3, H, NL), jnp.float32) * 0.02
    # labelMaskDomain: one-hot selection of this domain's NL -> ND labels
    domain_label_ids = np.array([1, 3, 5, 6])
    sel = jnp.zeros((NL, ND), jnp.float32)
    sel = sel.at[jnp.asarray(domain_label_ids), jnp.arange(ND)].set(1.0)

    # --- run kernel -----------------------------------------------------------
    dist = verification_forward(
        claim_tok, claim_mask, claim_tijd, claim_num,
        ev_tok, ev_mask, ev_tijd, ev_num,
        meta, wr, br, lw, sel, ALPHA,
    )
    dist = jax.block_until_ready(dist)

    ref = reference_forward(
        claim_tok, claim_mask, claim_tijd, claim_num,
        ev_tok, ev_mask, ev_tijd, ev_num,
        meta, wr, br, lw, sel, ALPHA,
    )
    ref = jax.block_until_ready(ref)

    np.testing.assert_allclose(np.asarray(dist), np.asarray(ref),
                               rtol=1e-2, atol=1e-2)
    print("KERNEL_OK")
</pallas_src>

<mosaic_0001>
module attributes {stable_mosaic.version = 11 : i64} {
  func.func @_verification_kernel(%arg0: i32, %arg1: memref<1xi32, #tpu.memory_space<smem>>, %arg2: memref<8x16x768xbf16, #tpu.memory_space<vmem>>, %arg3: memref<8x16xf32, #tpu.memory_space<vmem>>, %arg4: memref<8x768xf32, #tpu.memory_space<vmem>>, %arg5: memref<768x128xf32, #tpu.memory_space<vmem>>, %arg6: memref<1x128xf32, #tpu.memory_space<vmem>>, %arg7: memref<1x128xf32, #tpu.memory_space<vmem>>, %arg8: memref<8x128xf32, #tpu.memory_space<vmem>>) attributes {dimension_semantics = [#tpu.dimension_semantics<arbitrary>], iteration_bounds = array<i64: 1>, scalar_prefetch = 1 : i64, scratch_operands = 1 : i64, tpu.core_type = #tpu.core_type<tc>, window_params = [{transform_indices = @transform_0, window_bounds = array<i64: 8, 16, 768>}, {transform_indices = @transform_1, window_bounds = array<i64: 8, 16>}, {transform_indices = @transform_2, window_bounds = array<i64: 8, 768>}, {pipeline_mode = #tpu.pipeline_mode<synchronous>, transform_indices = @transform_3, window_bounds = array<i64: 768, 128>}, {pipeline_mode = #tpu.pipeline_mode<synchronous>, transform_indices = @transform_4, window_bounds = array<i64: 1, 128>}, {pipeline_mode = #tpu.pipeline_mode<synchronous>, transform_indices = @transform_5, window_bounds = array<i64: 1, 128>}]} {
    %c0_i32 = arith.constant 0 : i32
    %0 = arith.cmpi eq, %arg0, %c0_i32 : i32
    %1 = arith.extui %0 : i1 to i32
    %c0_i32_0 = arith.constant 0 : i32
    %2 = arith.cmpi ne, %1, %c0_i32_0 : i32
    scf.if %2 {
      %cst_23 = arith.constant 0.000000e+00 : f32
      %50 = vector.broadcast %cst_23 : f32 to vector<8x128xf32>
      %c0_24 = arith.constant 0 : index
      %c0_25 = arith.constant 0 : index
      %51 = vector.load %arg8[%c0_24, %c0_25] : memref<8x128xf32, #tpu.memory_space<vmem>>, vector<8x128xf32>
      tpu.vector_store %arg8[%c0_24, %c0_25], %50 {strides = array<i32>} : memref<8x128xf32, #tpu.memory_space<vmem>>, vector<8x128xf32>,
    } else {
    }
    %c0 = arith.constant 0 : index
    %c0_1 = arith.constant 0 : index
    %c0_2 = arith.constant 0 : index
    %3 = vector.load %arg2[%c0, %c0_1, %c0_2] : memref<8x16x768xbf16, #tpu.memory_space<vmem>>, vector<8x16x768xbf16>
    %4 = arith.extf %3 : vector<8x16x768xbf16> to vector<8x16x768xf32>
    %c0_3 = arith.constant 0 : index
    %c0_4 = arith.constant 0 : index
    %5 = vector.load %arg3[%c0_3, %c0_4] : memref<8x16xf32, #tpu.memory_space<vmem>>, vector<8x16xf32>
    %6 = vector.shape_cast %5 : vector<8x16xf32> to vector<8x16x1xf32>
    %7 = vector.broadcast %6 : vector<8x16x1xf32> to vector<8x16x768xf32>
    %8 = arith.mulf %4, %7 : vector<8x16x768xf32>
    %cst = arith.constant dense<0.000000e+00> : vector<8x768xf32>
    %9 = vector.multi_reduction <add>, %8, %cst [1] : vector<8x16x768xf32> to vector<8x768xf32>
    %c0_5 = arith.constant 0 : index
    %c0_6 = arith.constant 0 : index
    %10 = vector.load %arg4[%c0_5, %c0_6] : memref<8x768xf32, #tpu.memory_space<vmem>>, vector<8x768xf32>
    %11 = arith.addf %9, %10 : vector<8x768xf32>
    %c0_7 = arith.constant 0 : index
    %c0_8 = arith.constant 0 : index
    %12 = vector.load %arg5[%c0_7, %c0_8] : memref<768x128xf32, #tpu.memory_space<vmem>>, vector<768x128xf32>
    %cst_9 = arith.constant dense<0.000000e+00> : vector<8x128xf32>
    %13 = tpu.matmul %11, %12, %cst_9 {dimension_numbers = #tpu.dot_dimension_numbers<[1], [0], [0], [1], [0, 0, 1, 1], [], []>} : vector<8x768xf32>, vector<768x128xf32>, vector<8x128xf32> -> vector<8x128xf32>
    %c0_10 = arith.constant 0 : index
    %c0_11 = arith.constant 0 : index
    %14 = vector.load %arg6[%c0_10, %c0_11] : memref<1x128xf32, #tpu.memory_space<vmem>>, vector<1x128xf32>
    %15 = vector.broadcast %14 : vector<1x128xf32> to vector<8x128xf32>
    %16 = arith.addf %13, %15 : vector<8x128xf32>
    %17 = tpu.iota {dimensions = array<i32: 1>} : vector<1x128xi32>
    %c4_i32 = arith.constant 4 : i32
    %18 = vector.broadcast %c4_i32 : i32 to vector<1x128xi32>
    %19 = arith.cmpi eq, %17, %18 : vector<1x128xi32>
    %cst_12 = arith.constant 0.000000e+00 : f32
    %20 = vector.shape_cast %19 : vector<1x128xi1> to vector<1x128xi1>
    %21 = vector.broadcast %20 : vector<1x128xi1> to vector<8x128xi1>
    %22 = vector.broadcast %cst_12 : f32 to vector<8x128xf32>
    %23 = arith.select %21, %16, %22 : vector<8x128xi1>, vector<8x128xf32>
    %cst_13 = arith.constant dense<0.000000e+00> : vector<8xf32>
    %24 = vector.multi_reduction <add>, %23, %cst_13 [1] : vector<8x128xf32> to vector<8xf32>
    %25 = vector.shape_cast %24 : vector<8xf32> to vector<8x1xf32>
    %cst_14 = arith.constant 0.000000e+00 : f32
    %26 = vector.broadcast %cst_14 : f32 to vector<8x1xf32>
    %27 = arith.subf %26, %25 : vector<8x1xf32>
    %28 = math.exp %27 : vector<8x1xf32>
    %cst_15 = arith.constant 1.000000e+00 : f32
    %29 = vector.broadcast %cst_15 : f32 to vector<8x1xf32>
    %30 = arith.addf %29, %28 : vector<8x1xf32>
    %31 = tpu.reciprocal %30 {approx = true} : vector<8x1xf32> -> vector<8x1xf32>
    %32 = tpu.iota {dimensions = array<i32: 0>} : vector<8x1xi32>
    %c8_i32 = arith.constant 8 : i32
    %33 = arith.muli %arg0, %c8_i32 : i32
    %34 = vector.broadcast %33 : i32 to vector<8x1xi32>
    %35 = arith.addi %32, %34 : vector<8x1xi32>
    %c0_16 = arith.constant 0 : index
    %36 = memref.load %arg1[%c0_16] : memref<1xi32, #tpu.memory_space<smem>>
    %37 = vector.broadcast %36 : i32 to vector<8x1xi32>
    %38 = arith.cmpi slt, %35, %37 : vector<8x1xi32>
    %39 = arith.extui %38 : vector<8x1xi1> to vector<8x1xi32>
    %40 = arith.sitofp %39 : vector<8x1xi32> to vector<8x1xf32>
    %c0_17 = arith.constant 0 : index
    %c0_18 = arith.constant 0 : index
    %41 = vector.load %arg8[%c0_17, %c0_18] : memref<8x128xf32, #tpu.memory_space<vmem>>, vector<8x128xf32>
    %42 = arith.mulf %40, %31 : vector<8x1xf32>
    %43 = vector.broadcast %42 : vector<8x1xf32> to vector<8x128xf32>
    %44 = arith.mulf %43, %16 : vector<8x128xf32>
    %45 = arith.addf %41, %44 : vector<8x128xf32>
    %c0_19 = arith.constant 0 : index
    %c0_20 = arith.constant 0 : index
    %46 = vector.load %arg8[%c0_19, %c0_20] : memref<8x128xf32, #tpu.memory_space<vmem>>, vector<8x128xf32>
    tpu.vector_store %arg8[%c0_19, %c0_20], %45 {strides = array<i32>} : memref<8x128xf32, #tpu.memory_space<vmem>>, vector<8x128xf32>,
    %c0_i32_21 = arith.constant 0 : i32
    %47 = arith.cmpi eq, %arg0, %c0_i32_21 : i32
    %48 = arith.extui %47 : i1 to i32
    %c0_i32_22 = arith.constant 0 : i32
    %49 = arith.cmpi ne, %48, %c0_i32_22 : i32
    scf.if %49 {
      %c0_23 = arith.constant 0 : index
      %c0_24 = arith.constant 0 : index
      %50 = vector.load %arg8[%c0_23, %c0_24] : memref<8x128xf32, #tpu.memory_space<vmem>>, vector<8x128xf32>
      %cst_25 = arith.constant dense<0.000000e+00> : vector<128xf32>
      %51 = vector.multi_reduction <add>, %50, %cst_25 [0] : vector<8x128xf32> to vector<128xf32>
      %52 = vector.shape_cast %51 : vector<128xf32> to vector<1x128xf32>
      %c0_26 = arith.constant 0 : index
      %c0_27 = arith.constant 0 : index
      %53 = vector.load %arg7[%c0_26, %c0_27] : memref<1x128xf32, #tpu.memory_space<vmem>>, vector<1x128xf32>
      tpu.vector_store %arg7[%c0_26, %c0_27], %52 {strides = array<i32>} : memref<1x128xf32, #tpu.memory_space<vmem>>, vector<1x128xf32>,
    } else {
    }
    return
  }
  func.func @transform_0(%arg0: i32, %arg1: memref<1xi32, #tpu.memory_space<smem>>) -> (i32, i32, i32) {
    %c0_i32 = arith.constant 0 : i32
    %c0_i32_0 = arith.constant 0 : i32
    %c0_i32_1 = arith.constant 0 : i32
    return %arg0, %c0_i32, %c0_i32_0 : i32, i32, i32
  }
  func.func @transform_1(%arg0: i32, %arg1: memref<1xi32, #tpu.memory_space<smem>>) -> (i32, i32) {
    %c0_i32 = arith.constant 0 : i32
    %c0_i32_0 = arith.constant 0 : i32
    return %arg0, %c0_i32 : i32, i32
  }
  func.func @transform_2(%arg0: i32, %arg1: memref<1xi32, #tpu.memory_space<smem>>) -> (i32, i32) {
    %c0_i32 = arith.constant 0 : i32
    %c0_i32_0 = arith.constant 0 : i32
    return %arg0, %c0_i32 : i32, i32
  }
  func.func @transform_3(%arg0: i32, %arg1: memref<1xi32, #tpu.memory_space<smem>>) -> (i32, i32) {
    %c0_i32 = arith.constant 0 : i32
    %c0_i32_0 = arith.constant 0 : i32
    %c0_i32_1 = arith.constant 0 : i32
    return %c0_i32, %c0_i32_0 : i32, i32
  }
  func.func @transform_4(%arg0: i32, %arg1: memref<1xi32, #tpu.memory_space<smem>>) -> (i32, i32) {
    %c0_i32 = arith.constant 0 : i32
    %c0_i32_0 = arith.constant 0 : i32
    %c0_i32_1 = arith.constant 0 : i32
    return %c0_i32, %c0_i32_0 : i32, i32
  }
  func.func @transform_5(%arg0: i32, %arg1: memref<1xi32, #tpu.memory_space<smem>>) -> (i32, i32) {
    %c0_i32 = arith.constant 0 : i32
    %c0_i32_0 = arith.constant 0 : i32
    %c0_i32_1 = arith.constant 0 : i32
    return %c0_i32, %c0_i32_0 : i32, i32
  }
}

</mosaic_0001>

<llo_original>
// kernel: tpu_custom_call.1
$region0: #{tpu_custom_call.1}
  #allocation0 [shape = 'u32[]', space=smem, size = 0x4, offset = 0x4, fixed_abs, tag = 'smem constant byte address 0x4 - core index']
  #allocation1 [shape = 'u32[144,128]{1,0:T(1,128)}', space=vmem, size = 0x12000, scoped, tag = 'internal scratch']
  #allocation2 [shape = 'f32[8,128]{1,0:T(8,128)}', space=vmem, size = 0x1000, scoped, tag = 'scratch operand']
  #allocation3 [shape = 's32[1]{0}', space=sflag, size = 0x4, scoped, tag = 'scoped memory for tpu_custom_call.1']
  #allocation4 [shape = 's32[1]{0:T(128)S(6)}', space=smem, size = 0x200, scoped, tag = 'prefetched SMEM operand 0']
  %s0 = inlined_call_operand.<no memory space> [shape: s32[1], index: 0, kind: input, shape index: {}]
  %s1 = inlined_call_operand.hbm [shape: bf16[8,16,768], index: 1, kind: input, shape index: {}]
  %s2 = inlined_call_operand.hbm [shape: f32[8,16], index: 2, kind: input, shape index: {}]
  %s3 = inlined_call_operand.hbm [shape: f32[8,768], index: 3, kind: input, shape index: {}]
  %s4 = inlined_call_operand.hbm [shape: f32[768,128], index: 4, kind: input, shape index: {}]
  %s5 = inlined_call_operand.vmem [shape: f32[1,128], index: 5, kind: input, shape index: {}]
  %s6 = inlined_call_operand.hbm [shape: f32[1,128], index: 6, kind: output, shape index: {}]
  %s7 = sld [smem:[#allocation0]]
  $region54: #{tpu_custom_call.1} parent=0
    _
  %s9 = ssub.s32 1, %s7
  %s10 = scalar_select 0, %s9, %s7
  %11 = sst [smem:[#allocation4]] %s0
  $region1: #{tpu_custom_call.1} parent=0
    #allocation5 [shape = 'u8[196608]{0}', space=vmem, size = 0x30000, scoped, tag = 'input window, operand 1, single buffered']
    #allocation6 [shape = 's32[1]{0}', space=sflag, size = 0x4, scoped, tag = 'scoped memory for tpu_custom_call.1']
    #allocation7 [shape = 's32[1]{0}', space=sflag, size = 0x4, scoped, tag = 'scoped memory for tpu_custom_call.1']
    #allocation8 [shape = 'u8[4096]{0}', space=vmem, size = 0x1000, scoped, tag = 'input window, operand 2, single buffered']
    #allocation9 [shape = 's32[1]{0}', space=sflag, size = 0x4, scoped, tag = 'scoped memory for tpu_custom_call.1']
    #allocation10 [shape = 'u8[24576]{0}', space=vmem, size = 0x6000, scoped, tag = 'input window, operand 3, single buffered']
    #allocation11 [shape = 'u8[393216]{0}', space=vmem, size = 0x60000, scoped, tag = 'input window, operand 4, single buffered']
    #allocation12 [shape = 's32[1]{0}', space=sflag, size = 0x4, scoped, tag = 'scoped memory for tpu_custom_call.1']
    #allocation13 [shape = 'u8[512]{0}', space=vmem, size = 0x400, scoped, tag = 'output window, operand 0, single buffered']
    %12 = vsyncpa [#allocation6], 0
    %13 = vsyncpa [#allocation9], 0
    %14 = vsyncpa [#allocation12], 0
    %15 = vsyncpa [#allocation7], 0
    // Predicated region
    $region2: #{tpu_custom_call.1} parent=1 // pred_check
      _
    $region3: #{tpu_custom_call.1} parent=1 // pred_check_branch
      %17 = sbr.rel (0) target = $region5
    $region4: #{tpu_custom_call.1} parent=1 // pred_region
      %s19 = ssub.s32 6144, 6144
      %20 = vsyncadd [#allocation6], %s19
      %s21 = sshll.u32 [#allocation5], 4
      %s22 = int_to_ptr.vmem [resolvable:$true] %s21
      %27 = dma.hbm_to_vmem [thread:$0]  %s1, 6144, %s22, [#allocation6], 384, 384, 24
    $region5: #{tpu_custom_call.1} parent=1 // pred_fallthru
      _
    // Predicated region
    $region6: #{tpu_custom_call.1} parent=1 // pred_check
      _
    $region7: #{tpu_custom_call.1} parent=1 // pred_check_branch
      %29 = sbr.rel (0) target = $region9
    $region8: #{tpu_custom_call.1} parent=1 // pred_region
      %s31 = ssub.s32 128, 128
      %32 = vsyncadd [#allocation9], %s31
      %s34 = sshll.u32 [#allocation8], 4
      %s35 = int_to_ptr.vmem [resolvable:$true] %s34
      %37 = dma.hbm_to_vmem [thread:$0]  %s2, 128, %s35, [#allocation9]
    $region9: #{tpu_custom_call.1} parent=1 // pred_fallthru
      _
    // Predicated region
    $region10: #{tpu_custom_call.1} parent=1 // pred_check
      _
    $region11: #{tpu_custom_call.1} parent=1 // pred_check_branch
      %39 = sbr.rel (0) target = $region13
    $region12: #{tpu_custom_call.1} parent=1 // pred_region
      %s41 = ssub.s32 768, 768
      %42 = vsyncadd [#allocation9], %s41
      %s44 = sshll.u32 [#allocation10], 4
      %s45 = int_to_ptr.vmem [resolvable:$true] %s44
      %47 = dma.hbm_to_vmem [thread:$0]  %s3, 768, %s45, [#allocation9]
    $region13: #{tpu_custom_call.1} parent=1 // pred_fallthru
      _
    // Predicated region
    $region14: #{tpu_custom_call.1} parent=1 // pred_check
      _
    $region15: #{tpu_custom_call.1} parent=1 // pred_check_branch
      %49 = sbr.rel (0) target = $region17
    $region16: #{tpu_custom_call.1} parent=1 // pred_region
      %s51 = ssub.s32 12288, 12288
      %52 = vsyncadd [#allocation12], %s51
      %s53 = sshll.u32 [#allocation11], 4
      %s54 = int_to_ptr.vmem [resolvable:$true] %s53
      %59 = dma.hbm_to_vmem [thread:$0]  %s4, 12288, %s54, [#allocation12], 128, 128, 8
    $region17: #{tpu_custom_call.1} parent=1 // pred_fallthru
      _
    // Predicated region
    $region18: #{tpu_custom_call.1} parent=1 // pred_check
      _
    $region19: #{tpu_custom_call.1} parent=1 // pred_check_branch
      %61 = sbr.rel (0) target = $region21
    $region20: #{tpu_custom_call.1} parent=1 // pred_region
      _
    $region21: #{tpu_custom_call.1} parent=1 // pred_fallthru
      _
    // Predicated region
    $region22: #{tpu_custom_call.1} parent=1 // pred_check
      _
    $region23: #{tpu_custom_call.1} parent=1 // pred_check_branch
      %63 = sbr.rel (0) target = $region25
    $region24: #{tpu_custom_call.1} parent=1 // pred_region
      %64 = dma.done [#allocation6], 6144
    $region25: #{tpu_custom_call.1} parent=1 // pred_fallthru
      _
    // Predicated region
    $region26: #{tpu_custom_call.1} parent=1 // pred_check
      _
    $region27: #{tpu_custom_call.1} parent=1 // pred_check_branch
      %66 = sbr.rel (0) target = $region29
    $region28: #{tpu_custom_call.1} parent=1 // pred_region
      %67 = dma.done [#allocation9], 128
    $region29: #{tpu_custom_call.1} parent=1 // pred_fallthru
      _
    // Predicated region
    $region30: #{tpu_custom_call.1} parent=1 // pred_check
      _
    $region31: #{tpu_custom_call.1} parent=1 // pred_check_branch
      %69 = sbr.rel (0) target = $region33
    $region32: #{tpu_custom_call.1} parent=1 // pred_region
      %70 = dma.done [#allocation9], 768
    $region33: #{tpu_custom_call.1} parent=1 // pred_fallthru
      _
    // Predicated region
    $region34: #{tpu_custom_call.1} parent=1 // pred_check
      _
    $region35: #{tpu_custom_call.1} parent=1 // pred_check_branch
      %72 = sbr.rel (0) target = $region37
    $region36: #{tpu_custom_call.1} parent=1 // pred_region
      %73 = dma.done [#allocation12], 12288
    $region37: #{tpu_custom_call.1} parent=1 // pred_fallthru
      _
    %p74 = scmp.eq.s32.totalorder 0, 0
    // Predicated region
    $region38: #{tpu_custom_call.1} parent=1 // pred_check
      %p75 = pneg %p74
    $region39: #{tpu_custom_call.1} parent=1 // pred_check_branch
      %77 = sbr.rel (%p75) target = $region41
    $region40: #{tpu_custom_call.1} parent=1 // pred_region
      %78 = vst [vmem:[#allocation2] sm:$0xff] 0.0
    $region41: #{tpu_custom_call.1} parent=1 // pred_fallthru
      _
    %v79 = vld [vmem:[#allocation5] sm:$0xff]
    %v80 = vld [vmem:[#allocation5 + $0x8] sm:$0xff]
    %v81 = vld [vmem:[#allocation5 + $0x10] sm:$0xff]
    %v82 = vld [vmem:[#allocation5 + $0x18] sm:$0xff]
    %v83 = vld [vmem:[#allocation5 + $0x20] sm:$0xff]
    %v84 = vld [vmem:[#allocation5 + $0x28] sm:$0xff]
    %v85 = vld [vmem:[#allocation5 + $0x30] sm:$0xff]
    %v86 = vld [vmem:[#allocation5 + $0x38] sm:$0xff]
    %v87 = vld [vmem:[#allocation5 + $0x40] sm:$0xff]
    %v88 = vld [vmem:[#allocation5 + $0x48] sm:$0xff]
    %v89 = vld [vmem:[#allocation5 + $0x50] sm:$0xff]
    %v90 = vld [vmem:[#allocation5 + $0x58] sm:$0xff]
    %v91 = vld [vmem:[#allocation5 + $0x60] sm:$0xff]
    %v92 = vld [vmem:[#allocation5 + $0x68] sm:$0xff]
    %v93 = vld [vmem:[#allocation5 + $0x70] sm:$0xff]
    %v94 = vld [vmem:[#allocation5 + $0x78] sm:$0xff]
    %v95 = vld [vmem:[#allocation5 + $0x80] sm:$0xff]
    %v96 = vld [vmem:[#allocation5 + $0x88] sm:$0xff]
    %v97 = vld [vmem:[#allocation5 + $0x90] sm:$0xff]
    %v98 = vld [vmem:[#allocation5 + $0x98] sm:$0xff]
    %v99 = vld [vmem:[#allocation5 + $0xa0] sm:$0xff]
    %v100 = vld [vmem:[#allocation5 + $0xa8] sm:$0xff]
    %v101 = vld [vmem:[#allocation5 + $0xb0] sm:$0xff]
    %v102 = vld [vmem:[#allocation5 + $0xb8] sm:$0xff]
    %v103 = vld [vmem:[#allocation5 + $0xc0] sm:$0xff]
    %v104 = vld [vmem:[#allocation5 + $0xc8] sm:$0xff]
    %v105 = vld [vmem:[#allocation5 + $0xd0] sm:$0xff]
    %v106 = vld [vmem:[#allocation5 + $0xd8] sm:$0xff]
    %v107 = vld [vmem:[#allocation5 + $0xe0] sm:$0xff]
    %v108 = vld [vmem:[#allocation5 + $0xe8] sm:$0xff]
    %v109 = vld [vmem:[#allocation5 + $0xf0] sm:$0xff]
    %v110 = vld [vmem:[#allocation5 + $0xf8] sm:$0xff]
    %v111 = vld [vmem:[#allocation5 + $0x100] sm:$0xff]
    %v112 = vld [vmem:[#allocation5 + $0x108] sm:$0xff]
    %v113 = vld [vmem:[#allocation5 + $0x110] sm:$0xff]
    %v114 = vld [vmem:[#allocation5 + $0x118] sm:$0xff]
    %v115 = vld [vmem:[#allocation5 + $0x120] sm:$0xff]
    %v116 = vld [vmem:[#allocation5 + $0x128] sm:$0xff]
    %v117 = vld [vmem:[#allocation5 + $0x130] sm:$0xff]
    %v118 = vld [vmem:[#allocation5 + $0x138] sm:$0xff]
    %v119 = vld [vmem:[#allocation5 + $0x140] sm:$0xff]
    %v120 = vld [vmem:[#allocation5 + $0x148] sm:$0xff]
    %v121 = vld [vmem:[#allocation5 + $0x150] sm:$0xff]
    %v122 = vld [vmem:[#allocation5 + $0x158] sm:$0xff]
    %v123 = vld [vmem:[#allocation5 + $0x160] sm:$0xff]
    %v124 = vld [vmem:[#allocation5 + $0x168] sm:$0xff]
    %v125 = vld [vmem:[#allocation5 + $0x170] sm:$0xff]
    %v126 = vld [vmem:[#allocation5 + $0x178] sm:$0xff]
    %v127 = vunpack.c.l.bf16 %v79
    %v128 = vunpack.c.h.bf16 %v79
    %v129 = vunpack.c.l.bf16 %v80
    %v130 = vunpack.c.h.bf16 %v80
    %v131 = vunpack.c.l.bf16 %v81
    %v132 = vunpack.c.h.bf16 %v81
    %v133 = vunpack.c.l.bf16 %v82
    %v134 = vunpack.c.h.bf16 %v82
    %v135 = vunpack.c.l.bf16 %v83
    %v136 = vunpack.c.h.bf16 %v83
    %v137 = vunpack.c.l.bf16 %v84
    %v138 = vunpack.c.h.bf16 %v84
    %v139 = vunpack.c.l.bf16 %v85
    %v140 = vunpack.c.h.bf16 %v85
    %v141 = vunpack.c.l.bf16 %v86
    %v142 = vunpack.c.h.bf16 %v86
    %v143 = vunpack.c.l.bf16 %v87
    %v144 = vunpack.c.h.bf16 %v87
    %v145 = vunpack.c.l.bf16 %v88
    %v146 = vunpack.c.h.bf16 %v88
    %v147 = vunpack.c.l.bf16 %v89
    %v148 = vunpack.c.h.bf16 %v89
    %v149 = vunpack.c.l.bf16 %v90
    %v150 = vunpack.c.h.bf16 %v90
    %v151 = vunpack.c.l.bf16 %v91
    %v152 = vunpack.c.h.bf16 %v91
    %v153 = vunpack.c.l.bf16 %v92
    %v154 = vunpack.c.h.bf16 %v92
    %v155 = vunpack.c.l.bf16 %v93
    %v156 = vunpack.c.h.bf16 %v93
    %v157 = vunpack.c.l.bf16 %v94
    %v158 = vunpack.c.h.bf16 %v94
    %v159 = vunpack.c.l.bf16 %v95
    %v160 = vunpack.c.h.bf16 %v95
    %v161 = vunpack.c.l.bf16 %v96
    %v162 = vunpack.c.h.bf16 %v96
    %v163 = vunpack.c.l.bf16 %v97
    %v164 = vunpack.c.h.bf16 %v97
    %v165 = vunpack.c.l.bf16 %v98
    %v166 = vunpack.c.h.bf16 %v98
    %v167 = vunpack.c.l.bf16 %v99
    %v168 = vunpack.c.h.bf16 %v99
    %v169 = vunpack.c.l.bf16 %v100
    %v170 = vunpack.c.h.bf16 %v100
    %v171 = vunpack.c.l.bf16 %v101
    %v172 = vunpack.c.h.bf16 %v101
    %v173 = vunpack.c.l.bf16 %v102
    %v174 = vunpack.c.h.bf16 %v102
    %v175 = vunpack.c.l.bf16 %v103
    %v176 = vunpack.c.h.bf16 %v103
    %v177 = vunpack.c.l.bf16 %v104
    %v178 = vunpack.c.h.bf16 %v104
    %v179 = vunpack.c.l.bf16 %v105
    %v180 = vunpack.c.h.bf16 %v105
    %v181 = vunpack.c.l.bf16 %v106
    %v182 = vunpack.c.h.bf16 %v106
    %v183 = vunpack.c.l.bf16 %v107
    %v184 = vunpack.c.h.bf16 %v107
    %v185 = vunpack.c.l.bf16 %v108
    %v186 = vunpack.c.h.bf16 %v108
    %v187 = vunpack.c.l.bf16 %v109
    %v188 = vunpack.c.h.bf16 %v109
    %v189 = vunpack.c.l.bf16 %v110
    %v190 = vunpack.c.h.bf16 %v110
    %v191 = vunpack.c.l.bf16 %v111
    %v192 = vunpack.c.h.bf16 %v111
    %v193 = vunpack.c.l.bf16 %v112
    %v194 = vunpack.c.h.bf16 %v112
    %v195 = vunpack.c.l.bf16 %v113
    %v196 = vunpack.c.h.bf16 %v113
    %v197 = vunpack.c.l.bf16 %v114
    %v198 = vunpack.c.h.bf16 %v114
    %v199 = vunpack.c.l.bf16 %v115
    %v200 = vunpack.c.h.bf16 %v115
    %v201 = vunpack.c.l.bf16 %v116
    %v202 = vunpack.c.h.bf16 %v116
    %v203 = vunpack.c.l.bf16 %v117
    %v204 = vunpack.c.h.bf16 %v117
    %v205 = vunpack.c.l.bf16 %v118
    %v206 = vunpack.c.h.bf16 %v118
    %v207 = vunpack.c.l.bf16 %v119
    %v208 = vunpack.c.h.bf16 %v119
    %v209 = vunpack.c.l.bf16 %v120
    %v210 = vunpack.c.h.bf16 %v120
    %v211 = vunpack.c.l.bf16 %v121
    %v212 = vunpack.c.h.bf16 %v121
    %v213 = vunpack.c.l.bf16 %v122
    %v214 = vunpack.c.h.bf16 %v122
    %v215 = vunpack.c.l.bf16 %v123
    %v216 = vunpack.c.h.bf16 %v123
    %v217 = vunpack.c.l.bf16 %v124
    %v218 = vunpack.c.h.bf16 %v124
    %v219 = vunpack.c.l.bf16 %v125
    %v220 = vunpack.c.h.bf16 %v125
    %v221 = vunpack.c.l.bf16 %v126
    %v222 = vunpack.c.h.bf16 %v126
    %v223 = vld [vmem:[#allocation8] sm:$0xff]
    %v224 = vlaneseq
    %v225 = vshrl.u32 %v224, 7
    %v226 = vsub.s32 0, %v225
    %v227 = vrot.slane %v223, %v226
    %229 = vbcast.lane.b32.xlu0 %v227, 256
    %v230 = vpop.permute.xlu0 %229
    %s232 = sor.u32 256, 8
    %233 = vbcast.lane.b32.xlu0 %v227, %s232
    %v234 = vpop.permute.xlu0 %233
    %v235 = vlaneseq
    %v236 = vshrl.u32 %v235, 7
    %v237 = vsub.s32 1, %v236
    %v238 = vrot.slane %v223, %v237
    %240 = vbcast.lane.b32.xlu0 %v238, 256
    %v241 = vpop.permute.xlu0 %240
    %s243 = sor.u32 256, 8
    %244 = vbcast.lane.b32.xlu0 %v238, %s243
    %v245 = vpop.permute.xlu0 %244
    %v246 = vlaneseq
    %v247 = vshrl.u32 %v246, 7
    %v248 = vsub.s32 2, %v247
    %v249 = vrot.slane %v223, %v248
    %251 = vbcast.lane.b32.xlu0 %v249, 256
    %v252 = vpop.permute.xlu0 %251
    %s254 = sor.u32 256, 8
    %255 = vbcast.lane.b32.xlu0 %v249, %s254
    %v256 = vpop.permute.xlu0 %255
    %v257 = vlaneseq
    %v258 = vshrl.u32 %v257, 7
    %v259 = vsub.s32 3, %v258
    %v260 = vrot.slane %v223, %v259
    %262 = vbcast.lane.b32.xlu0 %v260, 256
    %v263 = vpop.permute.xlu0 %262
    %s265 = sor.u32 256, 8
    %266 = vbcast.lane.b32.xlu0 %v260, %s265
    %v267 = vpop.permute.xlu0 %266
    %v268 = vlaneseq
    %v269 = vshrl.u32 %v268, 7
    %v270 = vsub.s32 4, %v269
    %v271 = vrot.slane %v223, %v270
    %273 = vbcast.lane.b32.xlu0 %v271, 256
    %v274 = vpop.permute.xlu0 %273
    %s276 = sor.u32 256, 8
    %277 = vbcast.lane.b32.xlu0 %v271, %s276
    %v278 = vpop.permute.xlu0 %277
    %v279 = vlaneseq
    %v280 = vshrl.u32 %v279, 7
    %v281 = vsub.s32 5, %v280
    %v282 = vrot.slane %v223, %v281
    %284 = vbcast.lane.b32.xlu0 %v282, 256
    %v285 = vpop.permute.xlu0 %284
    %s287 = sor.u32 256, 8
    %288 = vbcast.lane.b32.xlu0 %v282, %s287
    %v289 = vpop.permute.xlu0 %288
    %v290 = vlaneseq
    %v291 = vshrl.u32 %v290, 7
    %v292 = vsub.s32 6, %v291
    %v293 = vrot.slane %v223, %v292
    %295 = vbcast.lane.b32.xlu0 %v293, 256
    %v296 = vpop.permute.xlu0 %295
    %s298 = sor.u32 256, 8
    %299 = vbcast.lane.b32.xlu0 %v293, %s298
    %v300 = vpop.permute.xlu0 %299
    %v301 = vlaneseq
    %v302 = vshrl.u32 %v301, 7
    %v303 = vsub.s32 7, %v302
    %v304 = vrot.slane %v223, %v303
    %306 = vbcast.lane.b32.xlu0 %v304, 256
    %v307 = vpop.permute.xlu0 %306
    %s309 = sor.u32 256, 8
    %310 = vbcast.lane.b32.xlu0 %v304, %s309
    %v311 = vpop.permute.xlu0 %310
    %v312 = vmul.f32 %v127, %v230
    %v313 = vmul.f32 %v128, %v230
    %v314 = vmul.f32 %v129, %v230
    %v315 = vmul.f32 %v130, %v230
    %v316 = vmul.f32 %v131, %v230
    %v317 = vmul.f32 %v132, %v230
    %v318 = vmul.f32 %v133, %v234
    %v319 = vmul.f32 %v134, %v234
    %v320 = vmul.f32 %v135, %v234
    %v321 = vmul.f32 %v136, %v234
    %v322 = vmul.f32 %v137, %v234
    %v323 = vmul.f32 %v138, %v234
    %v324 = vmul.f32 %v139, %v241
    %v325 = vmul.f32 %v140, %v241
    %v326 = vmul.f32 %v141, %v241
    %v327 = vmul.f32 %v142, %v241
    %v328 = vmul.f32 %v143, %v241
    %v329 = vmul.f32 %v144, %v241
    %v330 = vmul.f32 %v145, %v245
    %v331 = vmul.f32 %v146, %v245
    %v332 = vmul.f32 %v147, %v245
    %v333 = vmul.f32 %v148, %v245
    %v334 = vmul.f32 %v149, %v245
    %v335 = vmul.f32 %v150, %v245
    %v336 = vmul.f32 %v151, %v252
    %v337 = vmul.f32 %v152, %v252
    %v338 = vmul.f32 %v153, %v252
    %v339 = vmul.f32 %v154, %v252
    %v340 = vmul.f32 %v155, %v252
    %v341 = vmul.f32 %v156, %v252
    %v342 = vmul.f32 %v157, %v256
    %v343 = vmul.f32 %v158, %v256
    %v344 = vmul.f32 %v159, %v256
    %v345 = vmul.f32 %v160, %v256
    %v346 = vmul.f32 %v161, %v256
    %v347 = vmul.f32 %v162, %v256
    %v348 = vmul.f32 %v163, %v263
    %v349 = vmul.f32 %v164, %v263
    %v350 = vmul.f32 %v165, %v263
    %v351 = vmul.f32 %v166, %v263
    %v352 = vmul.f32 %v167, %v263
    %v353 = vmul.f32 %v168, %v263
    %v354 = vmul.f32 %v169, %v267
    %v355 = vmul.f32 %v170, %v267
    %v356 = vmul.f32 %v171, %v267
    %v357 = vmul.f32 %v172, %v267
    %v358 = vmul.f32 %v173, %v267
    %v359 = vmul.f32 %v174, %v267
    %v360 = vmul.f32 %v175, %v274
    %v361 = vmul.f32 %v176, %v274
    %v362 = vmul.f32 %v177, %v274
    %v363 = vmul.f32 %v178, %v274
    %v364 = vmul.f32 %v179, %v274
    %v365 = vmul.f32 %v180, %v274
    %v366 = vmul.f32 %v181, %v278
    %v367 = vmul.f32 %v182, %v278
    %v368 = vmul.f32 %v183, %v278
    %v369 = vmul.f32 %v184, %v278
    %v370 = vmul.f32 %v185, %v278
    %v371 = vmul.f32 %v186, %v278
    %v372 = vmul.f32 %v187, %v285
    %v373 = vmul.f32 %v188, %v285
    %v374 = vmul.f32 %v189, %v285
    %v375 = vmul.f32 %v190, %v285
    %v376 = vmul.f32 %v191, %v285
    %v377 = vmul.f32 %v192, %v285
    %v378 = vmul.f32 %v193, %v289
    %v379 = vmul.f32 %v194, %v289
    %v380 = vmul.f32 %v195, %v289
    %v381 = vmul.f32 %v196, %v289
    %v382 = vmul.f32 %v197, %v289
    %v383 = vmul.f32 %v198, %v289
    %v384 = vmul.f32 %v199, %v296
    %v385 = vmul.f32 %v200, %v296
    %v386 = vmul.f32 %v201, %v296
    %v387 = vmul.f32 %v202, %v296
    %v388 = vmul.f32 %v203, %v296
    %v389 = vmul.f32 %v204, %v296
    %v390 = vmul.f32 %v205, %v300
    %v391 = vmul.f32 %v206, %v300
    %v392 = vmul.f32 %v207, %v300
    %v393 = vmul.f32 %v208, %v300
    %v394 = vmul.f32 %v209, %v300
    %v395 = vmul.f32 %v210, %v300
    %v396 = vmul.f32 %v211, %v307
    %v397 = vmul.f32 %v212, %v307
    %v398 = vmul.f32 %v213, %v307
    %v399 = vmul.f32 %v214, %v307
    %v400 = vmul.f32 %v215, %v307
    %v401 = vmul.f32 %v216, %v307
    %v402 = vmul.f32 %v217, %v311
    %v403 = vmul.f32 %v218, %v311
    %v404 = vmul.f32 %v219, %v311
    %v405 = vmul.f32 %v220, %v311
    %v406 = vmul.f32 %v221, %v311
    %v407 = vmul.f32 %v222, %v311
    %v408 = vadd.f32 %v312, %v318
    %v409 = vrot.slane %v408, 4
    %v410 = vadd.f32 %v408, %v409
    %v411 = vrot.slane %v410, 2
    %v412 = vadd.f32 %v410, %v411
    %v413 = vrot.slane %v412, 1
    %v414 = vadd.f32 %v412, %v413
    %v415 = vadd.f32 %v313, %v319
    %v416 = vrot.slane %v415, 4
    %v417 = vadd.f32 %v415, %v416
    %v418 = vrot.slane %v417, 2
    %v419 = vadd.f32 %v417, %v418
    %v420 = vrot.slane %v419, 1
    %v421 = vadd.f32 %v419, %v420
    %v422 = vadd.f32 %v314, %v320
    %v423 = vrot.slane %v422, 4
    %v424 = vadd.f32 %v422, %v423
    %v425 = vrot.slane %v424, 2
    %v426 = vadd.f32 %v424, %v425
    %v427 = vrot.slane %v426, 1
    %v428 = vadd.f32 %v426, %v427
    %v429 = vadd.f32 %v315, %v321
    %v430 = vrot.slane %v429, 4
    %v431 = vadd.f32 %v429, %v430
    %v432 = vrot.slane %v431, 2
    %v433 = vadd.f32 %v431, %v432
    %v434 = vrot.slane %v433, 1
    %v435 = vadd.f32 %v433, %v434
    %v436 = vadd.f32 %v316, %v322
    %v437 = vrot.slane %v436, 4
    %v438 = vadd.f32 %v436, %v437
    %v439 = vrot.slane %v438, 2
    %v440 = vadd.f32 %v438, %v439
    %v441 = vrot.slane %v440, 1
    %v442 = vadd.f32 %v440, %v441
    %v443 = vadd.f32 %v317, %v323
    %v444 = vrot.slane %v443, 4
    %v445 = vadd.f32 %v443, %v444
    %v446 = vrot.slane %v445, 2
    %v447 = vadd.f32 %v445, %v446
    %v448 = vrot.slane %v447, 1
    %v449 = vadd.f32 %v447, %v448
    %v450 = vadd.f32 %v324, %v330
    %v451 = vrot.slane %v450, 4
    %v452 = vadd.f32 %v450, %v451
    %v453 = vrot.slane %v452, 2
    %v454 = vadd.f32 %v452, %v453
    %v455 = vrot.slane %v454, 1
    %v456 = vadd.f32 %v454, %v455
    %v457 = vadd.f32 %v325, %v331
    %v458 = vrot.slane %v457, 4
    %v459 = vadd.f32 %v457, %v458
    %v460 = vrot.slane %v459, 2
    %v461 = vadd.f32 %v459, %v460
    %v462 = vrot.slane %v461, 1
    %v463 = vadd.f32 %v461, %v462
    %v464 = vadd.f32 %v326, %v332
    %v465 = vrot.slane %v464, 4
    %v466 = vadd.f32 %v464, %v465
    %v467 = vrot.slane %v466, 2
    %v468 = vadd.f32 %v466, %v467
    %v469 = vrot.slane %v468, 1
    %v470 = vadd.f32 %v468, %v469
    %v471 = vadd.f32 %v327, %v333
    %v472 = vrot.slane %v471, 4
    %v473 = vadd.f32 %v471, %v472
    %v474 = vrot.slane %v473, 2
    %v475 = vadd.f32 %v473, %v474
    %v476 = vrot.slane %v475, 1
    %v477 = vadd.f32 %v475, %v476
    %v478 = vadd.f32 %v328, %v334
    %v479 = vrot.slane %v478, 4
    %v480 = vadd.f32 %v478, %v479
    %v481 = vrot.slane %v480, 2
    %v482 = vadd.f32 %v480, %v481
    %v483 = vrot.slane %v482, 1
    %v484 = vadd.f32 %v482, %v483
    %v485 = vadd.f32 %v329, %v335
    %v486 = vrot.slane %v485, 4
    %v487 = vadd.f32 %v485, %v486
    %v488 = vrot.slane %v487, 2
    %v489 = vadd.f32 %v487, %v488
    %v490 = vrot.slane %v489, 1
    %v491 = vadd.f32 %v489, %v490
    %v492 = vadd.f32 %v336, %v342
    %v493 = vrot.slane %v492, 4
    %v494 = vadd.f32 %v492, %v493
    %v495 = vrot.slane %v494, 2
    %v496 = vadd.f32 %v494, %v495
    %v497 = vrot.slane %v496, 1
    %v498 = vadd.f32 %v496, %v497
    %v499 = vadd.f32 %v337, %v343
    %v500 = vrot.slane %v499, 4
    %v501 = vadd.f32 %v499, %v500
    %v502 = vrot.slane %v501, 2
    %v503 = vadd.f32 %v501, %v502
    %v504 = vrot.slane %v503, 1
    %v505 = vadd.f32 %v503, %v504
    %v506 = vadd.f32 %v338, %v344
    %v507 = vrot.slane %v506, 4
    %v508 = vadd.f32 %v506, %v507
    %v509 = vrot.slane %v508, 2
    %v510 = vadd.f32 %v508, %v509
    %v511 = vrot.slane %v510, 1
    %v512 = vadd.f32 %v510, %v511
    %v513 = vadd.f32 %v339, %v345
    %v514 = vrot.slane %v513, 4
    %v515 = vadd.f32 %v513, %v514
    %v516 = vrot.slane %v515, 2
    %v517 = vadd.f32 %v515, %v516
    %v518 = vrot.slane %v517, 1
    %v519 = vadd.f32 %v517, %v518
    %v520 = vadd.f32 %v340, %v346
    %v521 = vrot.slane %v520, 4
    %v522 = vadd.f32 %v520, %v521
    %v523 = vrot.slane %v522, 2
    %v524 = vadd.f32 %v522, %v523
    %v525 = vrot.slane %v524, 1
    %v526 = vadd.f32 %v524, %v525
    %v527 = vadd.f32 %v341, %v347
    %v528 = vrot.slane %v527, 4
    %v529 = vadd.f32 %v527, %v528
    %v530 = vrot.slane %v529, 2
    %v531 = vadd.f32 %v529, %v530
    %v532 = vrot.slane %v531, 1
    %v533 = vadd.f32 %v531, %v532
    %v534 = vadd.f32 %v348, %v354
    %v535 = vrot.slane %v534, 4
    %v536 = vadd.f32 %v534, %v535
    %v537 = vrot.slane %v536, 2
    %v538 = vadd.f32 %v536, %v537
    %v539 = vrot.slane %v538, 1
    %v540 = vadd.f32 %v538, %v539
    %v541 = vadd.f32 %v349, %v355
    %v542 = vrot.slane %v541, 4
    %v543 = vadd.f32 %v541, %v542
    %v544 = vrot.slane %v543, 2
    %v545 = vadd.f32 %v543, %v544
    %v546 = vrot.slane %v545, 1
    %v547 = vadd.f32 %v545, %v546
    %v548 = vadd.f32 %v350, %v356
    %v549 = vrot.slane %v548, 4
    %v550 = vadd.f32 %v548, %v549
    %v551 = vrot.slane %v550, 2
    %v552 = vadd.f32 %v550, %v551
    %v553 = vrot.slane %v552, 1
    %v554 = vadd.f32 %v552, %v553
    %v555 = vadd.f32 %v351, %v357
    %v556 = vrot.slane %v555, 4
    %v557 = vadd.f32 %v555, %v556
    %v558 = vrot.slane %v557, 2
    %v559 = vadd.f32 %v557, %v558
    %v560 = vrot.slane %v559, 1
    %v561 = vadd.f32 %v559, %v560
    %v562 = vadd.f32 %v352, %v358
    %v563 = vrot.slane %v562, 4
    %v564 = vadd.f32 %v562, %v563
    %v565 = vrot.slane %v564, 2
    %v566 = vadd.f32 %v564, %v565
    %v567 = vrot.slane %v566, 1
    %v568 = vadd.f32 %v566, %v567
    %v569 = vadd.f32 %v353, %v359
    %v570 = vrot.slane %v569, 4
    %v571 = vadd.f32 %v569, %v570
    %v572 = vrot.slane %v571, 2
    %v573 = vadd.f32 %v571, %v572
    %v574 = vrot.slane %v573, 1
    %v575 = vadd.f32 %v573, %v574
    %v576 = vadd.f32 %v360, %v366
    %v577 = vrot.slane %v576, 4
    %v578 = vadd.f32 %v576, %v577
    %v579 = vrot.slane %v578, 2
    %v580 = vadd.f32 %v578, %v579
    %v581 = vrot.slane %v580, 1
    %v582 = vadd.f32 %v580, %v581
    %v583 = vadd.f32 %v361, %v367
    %v584 = vrot.slane %v583, 4
    %v585 = vadd.f32 %v583, %v584
    %v586 = vrot.slane %v585, 2
    %v587 = vadd.f32 %v585, %v586
    %v588 = vrot.slane %v587, 1
    %v589 = vadd.f32 %v587, %v588
    %v590 = vadd.f32 %v362, %v368
    %v591 = vrot.slane %v590, 4
    %v592 = vadd.f32 %v590, %v591
    %v593 = vrot.slane %v592, 2
    %v594 = vadd.f32 %v592, %v593
    %v595 = vrot.slane %v594, 1
    %v596 = vadd.f32 %v594, %v595
    %v597 = vadd.f32 %v363, %v369
    %v598 = vrot.slane %v597, 4
    %v599 = vadd.f32 %v597, %v598
    %v600 = vrot.slane %v599, 2
    %v601 = vadd.f32 %v599, %v600
    %v602 = vrot.slane %v601, 1
    %v603 = vadd.f32 %v601, %v602
    %v604 = vadd.f32 %v364, %v370
    %v605 = vrot.slane %v604, 4
    %v606 = vadd.f32 %v604, %v605
    %v607 = vrot.slane %v606, 2
    %v608 = vadd.f32 %v606, %v607
    %v609 = vrot.slane %v608, 1
    %v610 = vadd.f32 %v608, %v609
    %v611 = vadd.f32 %v365, %v371
    %v612 = vrot.slane %v611, 4
    %v613 = vadd.f32 %v611, %v612
    %v614 = vrot.slane %v613, 2
    %v615 = vadd.f32 %v613, %v614
    %v616 = vrot.slane %v615, 1
    %v617 = vadd.f32 %v615, %v616
    %v618 = vadd.f32 %v372, %v378
    %v619 = vrot.slane %v618, 4
    %v620 = vadd.f32 %v618, %v619
    %v621 = vrot.slane %v620, 2
    %v622 = vadd.f32 %v620, %v621
    %v623 = vrot.slane %v622, 1
    %v624 = vadd.f32 %v622, %v623
    %v625 = vadd.f32 %v373, %v379
    %v626 = vrot.slane %v625, 4
    %v627 = vadd.f32 %v625, %v626
    %v628 = vrot.slane %v627, 2
    %v629 = vadd.f32 %v627, %v628
    %v630 = vrot.slane %v629, 1
    %v631 = vadd.f32 %v629, %v630
    %v632 = vadd.f32 %v374, %v380
    %v633 = vrot.slane %v632, 4
    %v634 = vadd.f32 %v632, %v633
    %v635 = vrot.slane %v634, 2
    %v636 = vadd.f32 %v634, %v635
    %v637 = vrot.slane %v636, 1
    %v638 = vadd.f32 %v636, %v637
    %v639 = vadd.f32 %v375, %v381
    %v640 = vrot.slane %v639, 4
    %v641 = vadd.f32 %v639, %v640
    %v642 = vrot.slane %v641, 2
    %v643 = vadd.f32 %v641, %v642
    %v644 = vrot.slane %v643, 1
    %v645 = vadd.f32 %v643, %v644
    %v646 = vadd.f32 %v376, %v382
    %v647 = vrot.slane %v646, 4
    %v648 = vadd.f32 %v646, %v647
    %v649 = vrot.slane %v648, 2
    %v650 = vadd.f32 %v648, %v649
    %v651 = vrot.slane %v650, 1
    %v652 = vadd.f32 %v650, %v651
    %v653 = vadd.f32 %v377, %v383
    %v654 = vrot.slane %v653, 4
    %v655 = vadd.f32 %v653, %v654
    %v656 = vrot.slane %v655, 2
    %v657 = vadd.f32 %v655, %v656
    %v658 = vrot.slane %v657, 1
    %v659 = vadd.f32 %v657, %v658
    %v660 = vadd.f32 %v384, %v390
    %v661 = vrot.slane %v660, 4
    %v662 = vadd.f32 %v660, %v661
    %v663 = vrot.slane %v662, 2
    %v664 = vadd.f32 %v662, %v663
    %v665 = vrot.slane %v664, 1
    %v666 = vadd.f32 %v664, %v665
    %v667 = vadd.f32 %v385, %v391
    %v668 = vrot.slane %v667, 4
    %v669 = vadd.f32 %v667, %v668
    %v670 = vrot.slane %v669, 2
    %v671 = vadd.f32 %v669, %v670
    %v672 = vrot.slane %v671, 1
    %v673 = vadd.f32 %v671, %v672
    %v674 = vadd.f32 %v386, %v392
    %v675 = vrot.slane %v674, 4
    %v676 = vadd.f32 %v674, %v675
    %v677 = vrot.slane %v676, 2
    %v678 = vadd.f32 %v676, %v677
    %v679 = vrot.slane %v678, 1
    %v680 = vadd.f32 %v678, %v679
    %v681 = vadd.f32 %v387, %v393
    %v682 = vrot.slane %v681, 4
    %v683 = vadd.f32 %v681, %v682
    %v684 = vrot.slane %v683, 2
    %v685 = vadd.f32 %v683, %v684
    %v686 = vrot.slane %v685, 1
    %v687 = vadd.f32 %v685, %v686
    %v688 = vadd.f32 %v388, %v394
    %v689 = vrot.slane %v688, 4
    %v690 = vadd.f32 %v688, %v689
    %v691 = vrot.slane %v690, 2
    %v692 = vadd.f32 %v690, %v691
    %v693 = vrot.slane %v692, 1
    %v694 = vadd.f32 %v692, %v693
    %v695 = vadd.f32 %v389, %v395
    %v696 = vrot.slane %v695, 4
    %v697 = vadd.f32 %v695, %v696
    %v698 = vrot.slane %v697, 2
    %v699 = vadd.f32 %v697, %v698
    %v700 = vrot.slane %v699, 1
    %v701 = vadd.f32 %v699, %v700
    %v702 = vadd.f32 %v396, %v402
    %v703 = vrot.slane %v702, 4
    %v704 = vadd.f32 %v702, %v703
    %v705 = vrot.slane %v704, 2
    %v706 = vadd.f32 %v704, %v705
    %v707 = vrot.slane %v706, 1
    %v708 = vadd.f32 %v706, %v707
    %v709 = vadd.f32 %v397, %v403
    %v710 = vrot.slane %v709, 4
    %v711 = vadd.f32 %v709, %v710
    %v712 = vrot.slane %v711, 2
    %v713 = vadd.f32 %v711, %v712
    %v714 = vrot.slane %v713, 1
    %v715 = vadd.f32 %v713, %v714
    %v716 = vadd.f32 %v398, %v404
    %v717 = vrot.slane %v716, 4
    %v718 = vadd.f32 %v716, %v717
    %v719 = vrot.slane %v718, 2
    %v720 = vadd.f32 %v718, %v719
    %v721 = vrot.slane %v720, 1
    %v722 = vadd.f32 %v720, %v721
    %v723 = vadd.f32 %v399, %v405
    %v724 = vrot.slane %v723, 4
    %v725 = vadd.f32 %v723, %v724
    %v726 = vrot.slane %v725, 2
    %v727 = vadd.f32 %v725, %v726
    %v728 = vrot.slane %v727, 1
    %v729 = vadd.f32 %v727, %v728
    %v730 = vadd.f32 %v400, %v406
    %v731 = vrot.slane %v730, 4
    %v732 = vadd.f32 %v730, %v731
    %v733 = vrot.slane %v732, 2
    %v734 = vadd.f32 %v732, %v733
    %v735 = vrot.slane %v734, 1
    %v736 = vadd.f32 %v734, %v735
    %v737 = vadd.f32 %v401, %v407
    %v738 = vrot.slane %v737, 4
    %v739 = vadd.f32 %v737, %v738
    %v740 = vrot.slane %v739, 2
    %v741 = vadd.f32 %v739, %v740
    %v742 = vrot.slane %v741, 1
    %v743 = vadd.f32 %v741, %v742
    %v744 = vld [vmem:[#allocation10] sm:$0xff]
    %v745 = vld [vmem:[#allocation10 + $0x8] sm:$0xff]
    %v746 = vld [vmem:[#allocation10 + $0x10] sm:$0xff]
    %v747 = vld [vmem:[#allocation10 + $0x18] sm:$0xff]
    %v748 = vld [vmem:[#allocation10 + $0x20] sm:$0xff]
    %v749 = vld [vmem:[#allocation10 + $0x28] sm:$0xff]
    %v756 = vrot.slane %v744, 1
    %v757 = vrot.slane %v745, 1
    %v758 = vrot.slane %v746, 1
    %v759 = vrot.slane %v747, 1
    %v760 = vrot.slane %v748, 1
    %v761 = vrot.slane %v749, 1
    %v762 = vrot.slane %v744, 2
    %v763 = vrot.slane %v745, 2
    %v764 = vrot.slane %v746, 2
    %v765 = vrot.slane %v747, 2
    %v766 = vrot.slane %v748, 2
    %v767 = vrot.slane %v749, 2
    %v768 = vrot.slane %v744, 3
    %v769 = vrot.slane %v745, 3
    %v770 = vrot.slane %v746, 3
    %v771 = vrot.slane %v747, 3
    %v772 = vrot.slane %v748, 3
    %v773 = vrot.slane %v749, 3
    %v774 = vrot.slane %v744, 4
    %v775 = vrot.slane %v745, 4
    %v776 = vrot.slane %v746, 4
    %v777 = vrot.slane %v747, 4
    %v778 = vrot.slane %v748, 4
    %v779 = vrot.slane %v749, 4
    %v780 = vrot.slane %v744, 5
    %v781 = vrot.slane %v745, 5
    %v782 = vrot.slane %v746, 5
    %v783 = vrot.slane %v747, 5
    %v784 = vrot.slane %v748, 5
    %v785 = vrot.slane %v749, 5
    %v786 = vrot.slane %v744, 6
    %v787 = vrot.slane %v745, 6
    %v788 = vrot.slane %v746, 6
    %v789 = vrot.slane %v747, 6
    %v790 = vrot.slane %v748, 6
    %v791 = vrot.slane %v749, 6
    %v792 = vrot.slane %v744, 7
    %v793 = vrot.slane %v745, 7
    %v794 = vrot.slane %v746, 7
    %v795 = vrot.slane %v747, 7
    %v796 = vrot.slane %v748, 7
    %v797 = vrot.slane %v749, 7
    %v846 = vadd.f32 %v414, %v744
    %v847 = vadd.f32 %v421, %v745
    %v848 = vadd.f32 %v428, %v746
    %v849 = vadd.f32 %v435, %v747
    %v850 = vadd.f32 %v442, %v748
    %v851 = vadd.f32 %v449, %v749
    %v852 = vadd.f32 %v456, %v756
    %v853 = vadd.f32 %v463, %v757
    %v854 = vadd.f32 %v470, %v758
    %v855 = vadd.f32 %v477, %v759
    %v856 = vadd.f32 %v484, %v760
    %v857 = vadd.f32 %v491, %v761
    %v858 = vadd.f32 %v498, %v762
    %v859 = vadd.f32 %v505, %v763
    %v860 = vadd.f32 %v512, %v764
    %v861 = vadd.f32 %v519, %v765
    %v862 = vadd.f32 %v526, %v766
    %v863 = vadd.f32 %v533, %v767
    %v864 = vadd.f32 %v540, %v768
    %v865 = vadd.f32 %v547, %v769
    %v866 = vadd.f32 %v554, %v770
    %v867 = vadd.f32 %v561, %v771
    %v868 = vadd.f32 %v568, %v772
    %v869 = vadd.f32 %v575, %v773
    %v870 = vadd.f32 %v582, %v774
    %v871 = vadd.f32 %v589, %v775
    %v872 = vadd.f32 %v596, %v776
    %v873 = vadd.f32 %v603, %v777
    %v874 = vadd.f32 %v610, %v778
    %v875 = vadd.f32 %v617, %v779
    %v876 = vadd.f32 %v624, %v780
    %v877 = vadd.f32 %v631, %v781
    %v878 = vadd.f32 %v638, %v782
    %v879 = vadd.f32 %v645, %v783
    %v880 = vadd.f32 %v652, %v784
    %v881 = vadd.f32 %v659, %v785
    %v882 = vadd.f32 %v666, %v786
    %v883 = vadd.f32 %v673, %v787
    %v884 = vadd.f32 %v680, %v788
    %v885 = vadd.f32 %v687, %v789
    %v886 = vadd.f32 %v694, %v790
    %v887 = vadd.f32 %v701, %v791
    %v888 = vadd.f32 %v708, %v792
    %v889 = vadd.f32 %v715, %v793
    %v890 = vadd.f32 %v722, %v794
    %v891 = vadd.f32 %v729, %v795
    %v892 = vadd.f32 %v736, %v796
    %v893 = vadd.f32 %v743, %v797
    %v894 = vld [vmem:[#allocation11] sm:$0xff]
    %v895 = vld [vmem:[#allocation11 + $0x8] sm:$0xff]
    %v896 = vld [vmem:[#allocation11 + $0x10] sm:$0xff]
    %v897 = vld [vmem:[#allocation11 + $0x18] sm:$0xff]
    %v898 = vld [vmem:[#allocation11 + $0x20] sm:$0xff]
    %v899 = vld [vmem:[#allocation11 + $0x28] sm:$0xff]
    %v900 = vld [vmem:[#allocation11 + $0x30] sm:$0xff]
    %v901 = vld [vmem:[#allocation11 + $0x38] sm:$0xff]
    %v902 = vld [vmem:[#allocation11 + $0x40] sm:$0xff]
    %v903 = vld [vmem:[#allocation11 + $0x48] sm:$0xff]
    %v904 = vld [vmem:[#allocation11 + $0x50] sm:$0xff]
    %v905 = vld [vmem:[#allocation11 + $0x58] sm:$0xff]
    %v906 = vld [vmem:[#allocation11 + $0x60] sm:$0xff]
    %v907 = vld [vmem:[#allocation11 + $0x68] sm:$0xff]
    %v908 = vld [vmem:[#allocation11 + $0x70] sm:$0xff]
    %v909 = vld [vmem:[#allocation11 + $0x78] sm:$0xff]
    %v910 = vld [vmem:[#allocation11 + $0x80] sm:$0xff]
    %v911 = vld [vmem:[#allocation11 + $0x88] sm:$0xff]
    %v912 = vld [vmem:[#allocation11 + $0x90] sm:$0xff]
    %v913 = vld [vmem:[#allocation11 + $0x98] sm:$0xff]
    %v914 = vld [vmem:[#allocation11 + $0xa0] sm:$0xff]
    %v915 = vld [vmem:[#allocation11 + $0xa8] sm:$0xff]
    %v916 = vld [vmem:[#allocation11 + $0xb0] sm:$0xff]
    %v917 = vld [vmem:[#allocation11 + $0xb8] sm:$0xff]
    %v918 = vld [vmem:[#allocation11 + $0xc0] sm:$0xff]
    %v919 = vld [vmem:[#allocation11 + $0xc8] sm:$0xff]
    %v920 = vld [vmem:[#allocation11 + $0xd0] sm:$0xff]
    %v921 = vld [vmem:[#allocation11 + $0xd8] sm:$0xff]
    %v922 = vld [vmem:[#allocation11 + $0xe0] sm:$0xff]
    %v923 = vld [vmem:[#allocation11 + $0xe8] sm:$0xff]
    %v924 = vld [vmem:[#allocation11 + $0xf0] sm:$0xff]
    %v925 = vld [vmem:[#allocation11 + $0xf8] sm:$0xff]
    %v926 = vld [vmem:[#allocation11 + $0x100] sm:$0xff]
    %v927 = vld [vmem:[#allocation11 + $0x108] sm:$0xff]
    %v928 = vld [vmem:[#allocation11 + $0x110] sm:$0xff]
    %v929 = vld [vmem:[#allocation11 + $0x118] sm:$0xff]
    %v930 = vld [vmem:[#allocation11 + $0x120] sm:$0xff]
    %v931 = vld [vmem:[#allocation11 + $0x128] sm:$0xff]
    %v932 = vld [vmem:[#allocation11 + $0x130] sm:$0xff]
    %v933 = vld [vmem:[#allocation11 + $0x138] sm:$0xff]
    %v934 = vld [vmem:[#allocation11 + $0x140] sm:$0xff]
    %v935 = vld [vmem:[#allocation11 + $0x148] sm:$0xff]
    %v936 = vld [vmem:[#allocation11 + $0x150] sm:$0xff]
    %v937 = vld [vmem:[#allocation11 + $0x158] sm:$0xff]
    %v938 = vld [vmem:[#allocation11 + $0x160] sm:$0xff]
    %v939 = vld [vmem:[#allocation11 + $0x168] sm:$0xff]
    %v940 = vld [vmem:[#allocation11 + $0x170] sm:$0xff]
    %v941 = vld [vmem:[#allocation11 + $0x178] sm:$0xff]
    %v942 = vld [vmem:[#allocation11 + $0x180] sm:$0xff]
    %v943 = vld [vmem:[#allocation11 + $0x188] sm:$0xff]
    %v944 = vld [vmem:[#allocation11 + $0x190] sm:$0xff]
    %v945 = vld [vmem:[#allocation11 + $0x198] sm:$0xff]
    %v946 = vld [vmem:[#allocation11 + $0x1a0] sm:$0xff]
    %v947 = vld [vmem:[#allocation11 + $0x1a8] sm:$0xff]
    %v948 = vld [vmem:[#allocation11 + $0x1b0] sm:$0xff]
    %v949 = vld [vmem:[#allocation11 + $0x1b8] sm:$0xff]
    %v950 = vld [vmem:[#allocation11 + $0x1c0] sm:$0xff]
    %v951 = vld [vmem:[#allocation11 + $0x1c8] sm:$0xff]
    %v952 = vld [vmem:[#allocation11 + $0x1d0] sm:$0xff]
    %v953 = vld [vmem:[#allocation11 + $0x1d8] sm:$0xff]
    %v954 = vld [vmem:[#allocation11 + $0x1e0] sm:$0xff]
    %v955 = vld [vmem:[#allocation11 + $0x1e8] sm:$0xff]
    %v956 = vld [vmem:[#allocation11 + $0x1f0] sm:$0xff]
    %v957 = vld [vmem:[#allocation11 + $0x1f8] sm:$0xff]
    %v958 = vld [vmem:[#allocation11 + $0x200] sm:$0xff]
    %v959 = vld [vmem:[#allocation11 + $0x208] sm:$0xff]
    %v960 = vld [vmem:[#allocation11 + $0x210] sm:$0xff]
    %v961 = vld [vmem:[#allocation11 + $0x218] sm:$0xff]
    %v962 = vld [vmem:[#allocation11 + $0x220] sm:$0xff]
    %v963 = vld [vmem:[#allocation11 + $0x228] sm:$0xff]
    %v964 = vld [vmem:[#allocation11 + $0x230] sm:$0xff]
    %v965 = vld [vmem:[#allocation11 + $0x238] sm:$0xff]
    %v966 = vld [vmem:[#allocation11 + $0x240] sm:$0xff]
    %v967 = vld [vmem:[#allocation11 + $0x248] sm:$0xff]
    %v968 = vld [vmem:[#allocation11 + $0x250] sm:$0xff]
    %v969 = vld [vmem:[#allocation11 + $0x258] sm:$0xff]
    %v970 = vld [vmem:[#allocation11 + $0x260] sm:$0xff]
    %v971 = vld [vmem:[#allocation11 + $0x268] sm:$0xff]
    %v972 = vld [vmem:[#allocation11 + $0x270] sm:$0xff]
    %v973 = vld [vmem:[#allocation11 + $0x278] sm:$0xff]
    %v974 = vld [vmem:[#allocation11 + $0x280] sm:$0xff]
    %v975 = vld [vmem:[#allocation11 + $0x288] sm:$0xff]
    %v976 = vld [vmem:[#allocation11 + $0x290] sm:$0xff]
    %v977 = vld [vmem:[#allocation11 + $0x298] sm:$0xff]
    %v978 = vld [vmem:[#allocation11 + $0x2a0] sm:$0xff]
    %v979 = vld [vmem:[#allocation11 + $0x2a8] sm:$0xff]
    %v980 = vld [vmem:[#allocation11 + $0x2b0] sm:$0xff]
    %v981 = vld [vmem:[#allocation11 + $0x2b8] sm:$0xff]
    %v982 = vld [vmem:[#allocation11 + $0x2c0] sm:$0xff]
    %v983 = vld [vmem:[#allocation11 + $0x2c8] sm:$0xff]
    %v984 = vld [vmem:[#allocation11 + $0x2d0] sm:$0xff]
    %v985 = vld [vmem:[#allocation11 + $0x2d8] sm:$0xff]
    %v986 = vld [vmem:[#allocation11 + $0x2e0] sm:$0xff]
    %v987 = vld [vmem:[#allocation11 + $0x2e8] sm:$0xff]
    %v988 = vld [vmem:[#allocation11 + $0x2f0] sm:$0xff]
    %v989 = vld [vmem:[#allocation11 + $0x2f8] sm:$0xff]
    %v990 = vld [vmem:[%s5] sm:$0x1]
    %v992 = vlaneseq
    %v993 = vshrl.u32 %v992, 7
    %v994 = vsub.s32 0, %v993
    %v995 = vrot.slane %v990, %v994
    %v1045 = vrot.slane %v852, 7
    %vm1046 = vcmask 1041409
    %v1047 = vsel %vm1046, %v1045, %v846
    %v1048 = vrot.slane %v858, 6
    %vm1049 = vcmask 1042434
    %v1050 = vsel %vm1049, %v1048, %v1047
    %v1051 = vrot.slane %v864, 5
    %vm1052 = vcmask 1043459
    %v1053 = vsel %vm1052, %v1051, %v1050
    %v1054 = vrot.slane %v870, 4
    %vm1055 = vcmask 1044484
    %v1056 = vsel %vm1055, %v1054, %v1053
    %v1057 = vrot.slane %v876, 3
    %vm1058 = vcmask 1045509
    %v1059 = vsel %vm1058, %v1057, %v1056
    %v1060 = vrot.slane %v882, 2
    %vm1061 = vcmask 1046534
    %v1062 = vsel %vm1061, %v1060, %v1059
    %v1063 = vrot.slane %v888, 1
    %vm1064 = vcmask 1047559
    %v1065 = vsel %vm1064, %v1063, %v1062
    %v1066 = vrot.slane %v853, 7
    %v1067 = vsel %vm1046, %v1066, %v847
    %v1068 = vrot.slane %v859, 6
    %v1069 = vsel %vm1049, %v1068, %v1067
    %v1070 = vrot.slane %v865, 5
    %v1071 = vsel %vm1052, %v1070, %v1069
    %v1072 = vrot.slane %v871, 4
    %v1073 = vsel %vm1055, %v1072, %v1071
    %v1074 = vrot.slane %v877, 3
    %v1075 = vsel %vm1058, %v1074, %v1073
    %v1076 = vrot.slane %v883, 2
    %v1077 = vsel %vm1061, %v1076, %v1075
    %v1078 = vrot.slane %v889, 1
    %v1079 = vsel %vm1064, %v1078, %v1077
    %v1080 = vrot.slane %v854, 7
    %v1081 = vsel %vm1046, %v1080, %v848
    %v1082 = vrot.slane %v860, 6
    %v1083 = vsel %vm1049, %v1082, %v1081
    %v1084 = vrot.slane %v866, 5
    %v1085 = vsel %vm1052, %v1084, %v1083
    %v1086 = vrot.slane %v872, 4
    %v1087 = vsel %vm1055, %v1086, %v1085
    %v1088 = vrot.slane %v878, 3
    %v1089 = vsel %vm1058, %v1088, %v1087
    %v1090 = vrot.slane %v884, 2
    %v1091 = vsel %vm1061, %v1090, %v1089
    %v1092 = vrot.slane %v890, 1
    %v1093 = vsel %vm1064, %v1092, %v1091
    %v1094 = vrot.slane %v855, 7
    %v1095 = vsel %vm1046, %v1094, %v849
    %v1096 = vrot.slane %v861, 6
    %v1097 = vsel %vm1049, %v1096, %v1095
    %v1098 = vrot.slane %v867, 5
    %v1099 = vsel %vm1052, %v1098, %v1097
    %v1100 = vrot.slane %v873, 4
    %v1101 = vsel %vm1055, %v1100, %v1099
    %v1102 = vrot.slane %v879, 3
    %v1103 = vsel %vm1058, %v1102, %v1101
    %v1104 = vrot.slane %v885, 2
    %v1105 = vsel %vm1061, %v1104, %v1103
    %v1106 = vrot.slane %v891, 1
    %v1107 = vsel %vm1064, %v1106, %v1105
    %v1108 = vrot.slane %v856, 7
    %v1109 = vsel %vm1046, %v1108, %v850
    %v1110 = vrot.slane %v862, 6
    %v1111 = vsel %vm1049, %v1110, %v1109
    %v1112 = vrot.slane %v868, 5
    %v1113 = vsel %vm1052, %v1112, %v1111
    %v1114 = vrot.slane %v874, 4
    %v1115 = vsel %vm1055, %v1114, %v1113
    %v1116 = vrot.slane %v880, 3
    %v1117 = vsel %vm1058, %v1116, %v1115
    %v1118 = vrot.slane %v886, 2
    %v1119 = vsel %vm1061, %v1118, %v1117
    %v1120 = vrot.slane %v892, 1
    %v1121 = vsel %vm1064, %v1120, %v1119
    %v1122 = vrot.slane %v857, 7
    %v1123 = vsel %vm1046, %v1122, %v851
    %v1124 = vrot.slane %v863, 6
    %v1125 = vsel %vm1049, %v1124, %v1123
    %v1126 = vrot.slane %v869, 5
    %v1127 = vsel %vm1052, %v1126, %v1125
    %v1128 = vrot.slane %v875, 4
    %v1129 = vsel %vm1055, %v1128, %v1127
    %v1130 = vrot.slane %v881, 3
    %v1131 = vsel %vm1058, %v1130, %v1129
    %v1132 = vrot.slane %v887, 2
    %v1133 = vsel %vm1061, %v1132, %v1131
    %v1134 = vrot.slane %v893, 1
    %v1135 = vsel %vm1064, %v1134, %v1133
    %1142 = vmatprep.subr.mxu0 0.0
    %1143 = vmatpush1.msra.mxu0 %v909
    %1144 = vmatprep.subr.mxu0 0.0
    %1145 = vmatpush1.msra.mxu0 %v908
    %1146 = vmatprep.subr.mxu0 0.0
    %1147 = vmatpush1.msra.mxu0 %v907
    %1148 = vmatprep.subr.mxu0 0.0
    %1149 = vmatpush1.msra.mxu0 %v906
    %1150 = vmatprep.subr.mxu0 0.0
    %1151 = vmatpush1.msra.mxu0 %v905
    %1152 = vmatprep.subr.mxu0 0.0
    %1153 = vmatpush1.msra.mxu0 %v904
    %1154 = vmatprep.subr.mxu0 0.0
    %1155 = vmatpush1.msra.mxu0 %v903
    %1156 = vmatprep.subr.mxu0 0.0
    %1157 = vmatpush1.msra.mxu0 %v902
    %1158 = vmatprep.subr.mxu0 0.0
    %1159 = vmatpush1.msra.mxu0 %v901
    %1160 = vmatprep.subr.mxu0 0.0
    %1161 = vmatpush1.msra.mxu0 %v900
    %1162 = vmatprep.subr.mxu0 0.0
    %1163 = vmatpush1.msra.mxu0 %v899
    %1164 = vmatprep.subr.mxu0 0.0
    %1165 = vmatpush1.msra.mxu0 %v898
    %1166 = vmatprep.subr.mxu0 0.0
    %1167 = vmatpush1.msra.mxu0 %v897
    %1168 = vmatprep.subr.mxu0 0.0
    %1169 = vmatpush1.msra.mxu0 %v896
    %1170 = vmatprep.subr.mxu0 0.0
    %1171 = vmatpush1.msra.mxu0 %v895
    %1172 = vmatprep.subr.mxu0 0.0
    %1173 = vmatpush1.msra.mxu0 %v894
    %1174 = vmatprep.subr.mxu0 0.0
    %1175 = vmatpush2.msra.mxu0 %v925
    %1176 = vmatprep.subr.mxu0 0.0
    %1177 = vmatpush2.msra.mxu0 %v924
    %1178 = vmatprep.subr.mxu0 0.0
    %1179 = vmatpush2.msra.mxu0 %v923
    %1180 = vmatprep.subr.mxu0 0.0
    %1181 = vmatpush2.msra.mxu0 %v922
    %1182 = vmatprep.subr.mxu0 0.0
    %1183 = vmatpush2.msra.mxu0 %v921
    %1184 = vmatprep.subr.mxu0 0.0
    %1185 = vmatpush2.msra.mxu0 %v920
    %1186 = vmatprep.subr.mxu0 0.0
    %1187 = vmatpush2.msra.mxu0 %v919
    %1188 = vmatprep.subr.mxu0 0.0
    %1189 = vmatpush2.msra.mxu0 %v918
    %1190 = vmatprep.subr.mxu0 0.0
    %1191 = vmatpush2.msra.mxu0 %v917
    %1192 = vmatprep.subr.mxu0 0.0
    %1193 = vmatpush2.msra.mxu0 %v916
    %1194 = vmatprep.subr.mxu0 0.0
    %1195 = vmatpush2.msra.mxu0 %v915
    %1196 = vmatprep.subr.mxu0 0.0
    %1197 = vmatpush2.msra.mxu0 %v914
    %1198 = vmatprep.subr.mxu0 0.0
    %1199 = vmatpush2.msra.mxu0 %v913
    %1200 = vmatprep.subr.mxu0 0.0
    %1201 = vmatpush2.msra.mxu0 %v912
    %1202 = vmatprep.subr.mxu0 0.0
    %1203 = vmatpush2.msra.mxu0 %v911
    %1204 = vmatprep.subr.mxu0 0.0
    %1205 = vmatpush2.msra.mxu0 %v910
    %1206 = vmatprep.mubr.f32.mxu0 %v1079
    %1207 = vmatmul.mubr.f32.gmra.mxu0 %v1065
    %v1208 = vpop.f32.mrf.mxu0
    %v1209 = vadd.f32 %v995, %v1208
    %v1210 = vpop.f32.mrf.mxu0
    %1211 = vdwg.mxu0
    %1212 = vmatprep.subr.mxu0 0.0
    %1213 = vmatpush1.msra.mxu0 %v941
    %1214 = vmatprep.subr.mxu0 0.0
    %1215 = vmatpush1.msra.mxu0 %v940
    %1216 = vmatprep.subr.mxu0 0.0
    %1217 = vmatpush1.msra.mxu0 %v939
    %1218 = vmatprep.subr.mxu0 0.0
    %1219 = vmatpush1.msra.mxu0 %v938
    %1220 = vmatprep.subr.mxu0 0.0
    %1221 = vmatpush1.msra.mxu0 %v937
    %1222 = vmatprep.subr.mxu0 0.0
    %1223 = vmatpush1.msra.mxu0 %v936
    %1224 = vmatprep.subr.mxu0 0.0
    %1225 = vmatpush1.msra.mxu0 %v935
    %1226 = vmatprep.subr.mxu0 0.0
    %1227 = vmatpush1.msra.mxu0 %v934
    %1228 = vmatprep.subr.mxu0 0.0
    %1229 = vmatpush1.msra.mxu0 %v933
    %1230 = vmatprep.subr.mxu0 0.0
    %1231 = vmatpush1.msra.mxu0 %v932
    %1232 = vmatprep.subr.mxu0 0.0
    %1233 = vmatpush1.msra.mxu0 %v931
    %1234 = vmatprep.subr.mxu0 0.0
    %1235 = vmatpush1.msra.mxu0 %v930
    %1236 = vmatprep.subr.mxu0 0.0
    %1237 = vmatpush1.msra.mxu0 %v929
    %1238 = vmatprep.subr.mxu0 0.0
    %1239 = vmatpush1.msra.mxu0 %v928
    %1240 = vmatprep.subr.mxu0 0.0
    %1241 = vmatpush1.msra.mxu0 %v927
    %1242 = vmatprep.subr.mxu0 0.0
    %1243 = vmatpush1.msra.mxu0 %v926
    %1244 = vmatprep.subr.mxu0 0.0
    %1245 = vmatpush2.msra.mxu0 %v957
    %1246 = vmatprep.subr.mxu0 0.0
    %1247 = vmatpush2.msra.mxu0 %v956
    %1248 = vmatprep.subr.mxu0 0.0
    %1249 = vmatpush2.msra.mxu0 %v955
    %1250 = vmatprep.subr.mxu0 0.0
    %1251 = vmatpush2.msra.mxu0 %v954
    %1252 = vmatprep.subr.mxu0 0.0
    %1253 = vmatpush2.msra.mxu0 %v953
    %1254 = vmatprep.subr.mxu0 0.0
    %1255 = vmatpush2.msra.mxu0 %v952
    %1256 = vmatprep.subr.mxu0 0.0
    %1257 = vmatpush2.msra.mxu0 %v951
    %1258 = vmatprep.subr.mxu0 0.0
    %1259 = vmatpush2.msra.mxu0 %v950
    %1260 = vmatprep.subr.mxu0 0.0
    %1261 = vmatpush2.msra.mxu0 %v949
    %1262 = vmatprep.subr.mxu0 0.0
    %1263 = vmatpush2.msra.mxu0 %v948
    %1264 = vmatprep.subr.mxu0 0.0
    %1265 = vmatpush2.msra.mxu0 %v947
    %1266 = vmatprep.subr.mxu0 0.0
    %1267 = vmatpush2.msra.mxu0 %v946
    %1268 = vmatprep.subr.mxu0 0.0
    %1269 = vmatpush2.msra.mxu0 %v945
    %1270 = vmatprep.subr.mxu0 0.0
    %1271 = vmatpush2.msra.mxu0 %v944
    %1272 = vmatprep.subr.mxu0 0.0
    %1273 = vmatpush2.msra.mxu0 %v943
    %1274 = vmatprep.subr.mxu0 0.0
    %1275 = vmatpush2.msra.mxu0 %v942
    %1276 = vmatprep.mubr.f32.mxu0 %v1107
    %1277 = vmatmul.mubr.f32.gmra.mxu0 %v1093
    %v1278 = vpop.f32.mrf.mxu0
    %v1279 = vadd.f32 %v1209, %v1278
    %v1280 = vpop.f32.mrf.mxu0
    %1281 = vdwg.mxu0
    %1282 = vmatprep.subr.mxu0 0.0
    %1283 = vmatpush1.msra.mxu0 %v973
    %1284 = vmatprep.subr.mxu0 0.0
    %1285 = vmatpush1.msra.mxu0 %v972
    %1286 = vmatprep.subr.mxu0 0.0
    %1287 = vmatpush1.msra.mxu0 %v971
    %1288 = vmatprep.subr.mxu0 0.0
    %1289 = vmatpush1.msra.mxu0 %v970
    %1290 = vmatprep.subr.mxu0 0.0
    %1291 = vmatpush1.msra.mxu0 %v969
    %1292 = vmatprep.subr.mxu0 0.0
    %1293 = vmatpush1.msra.mxu0 %v968
    %1294 = vmatprep.subr.mxu0 0.0
    %1295 = vmatpush1.msra.mxu0 %v967
    %1296 = vmatprep.subr.mxu0 0.0
    %1297 = vmatpush1.msra.mxu0 %v966
    %1298 = vmatprep.subr.mxu0 0.0
    %1299 = vmatpush1.msra.mxu0 %v965
    %1300 = vmatprep.subr.mxu0 0.0
    %1301 = vmatpush1.msra.mxu0 %v964
    %1302 = vmatprep.subr.mxu0 0.0
    %1303 = vmatpush1.msra.mxu0 %v963
    %1304 = vmatprep.subr.mxu0 0.0
    %1305 = vmatpush1.msra.mxu0 %v962
    %1306 = vmatprep.subr.mxu0 0.0
    %1307 = vmatpush1.msra.mxu0 %v961
    %1308 = vmatprep.subr.mxu0 0.0
    %1309 = vmatpush1.msra.mxu0 %v960
    %1310 = vmatprep.subr.mxu0 0.0
    %1311 = vmatpush1.msra.mxu0 %v959
    %1312 = vmatprep.subr.mxu0 0.0
    %1313 = vmatpush1.msra.mxu0 %v958
    %1314 = vmatprep.subr.mxu0 0.0
    %1315 = vmatpush2.msra.mxu0 %v989
    %1316 = vmatprep.subr.mxu0 0.0
    %1317 = vmatpush2.msra.mxu0 %v988
    %1318 = vmatprep.subr.mxu0 0.0
    %1319 = vmatpush2.msra.mxu0 %v987
    %1320 = vmatprep.subr.mxu0 0.0
    %1321 = vmatpush2.msra.mxu0 %v986
    %1322 = vmatprep.subr.mxu0 0.0
    %1323 = vmatpush2.msra.mxu0 %v985
    %1324 = vmatprep.subr.mxu0 0.0
    %1325 = vmatpush2.msra.mxu0 %v984
    %1326 = vmatprep.subr.mxu0 0.0
    %1327 = vmatpush2.msra.mxu0 %v983
    %1328 = vmatprep.subr.mxu0 0.0
    %1329 = vmatpush2.msra.mxu0 %v982
    %1330 = vmatprep.subr.mxu0 0.0
    %1331 = vmatpush2.msra.mxu0 %v981
    %1332 = vmatprep.subr.mxu0 0.0
    %1333 = vmatpush2.msra.mxu0 %v980
    %1334 = vmatprep.subr.mxu0 0.0
    %1335 = vmatpush2.msra.mxu0 %v979
    %1336 = vmatprep.subr.mxu0 0.0
    %1337 = vmatpush2.msra.mxu0 %v978
    %1338 = vmatprep.subr.mxu0 0.0
    %1339 = vmatpush2.msra.mxu0 %v977
    %1340 = vmatprep.subr.mxu0 0.0
    %1341 = vmatpush2.msra.mxu0 %v976
    %1342 = vmatprep.subr.mxu0 0.0
    %1343 = vmatpush2.msra.mxu0 %v975
    %1344 = vmatprep.subr.mxu0 0.0
    %1345 = vmatpush2.msra.mxu0 %v974
    %1346 = vmatprep.mubr.f32.mxu0 %v1135
    %1347 = vmatmul.mubr.f32.gmra.mxu0 %v1121
    %v1348 = vpop.f32.mrf.mxu0
    %v1349 = vadd.f32 %v1279, %v1348
    %v1350 = vpop.f32.mrf.mxu0
    %1351 = vdwg.mxu0
    %v1352 = vlaneseq
    %v1353 = vand.u32 %v1352, 127
    %vm1354 = vcmp.eq.s32.totalorder %v1353, 4
    %v1355 = vsel %vm1354, 1, 0
    %vm1356 = vcmp.eq.s32.totalorder %v1355, 1
    %v1357 = vsel %vm1356, %v1349, 0.0
    %1358 = vadd.xlane.f32.xlu0 %v1357
    %v1359 = vpop.xlane.xlu0 %1358
    %v1360 = vsub.f32 0.0, %v1359
    %v1361 = vmul.f32 %v1360, 1.442695
    %v1362 = vpow.pop %v1361
    %v1363 = vadd.f32 %v1362, 1.0
    %v1364 = vrcp.pop %v1363
    %v1365 = vlaneseq
    %v1366 = vshrl.u32 %v1365, 7
    %s1367 = smul.u32 0, 8
    %v1368 = vstv %s1367
    %v1369 = vadd.s32 %v1366, %v1368
    %s1370 = sld [smem:[#allocation4]]
    %v1371 = vstv %s1370
    %vm1372 = vcmp.lt.s32.totalorder %v1369, %v1371
    %v1373 = vsel %vm1372, 1, 0
    %v1374 = vcvt.s32.f32 %v1373
    %v1375 = vld [vmem:[#allocation2] sm:$0xff]
    %v1376 = vmul.f32 %v1374, %v1364
    %v1377 = vmul.f32 %v1376, %v1349
    %v1378 = vadd.f32 %v1375, %v1377
    %1379 = vst [vmem:[#allocation2] sm:$0xff] %v1378
    // Predicated region
    $region42: #{tpu_custom_call.1} parent=1 // pred_check
      %p1380 = pneg %p74
    $region43: #{tpu_custom_call.1} parent=1 // pred_check_branch
      %1382 = sbr.rel (%p1380) target = $region45
    $region44: #{tpu_custom_call.1} parent=1 // pred_region
      %v1383 = vld [vmem:[#allocation2] sm:$0xff]
      %v1384 = vrot.slane %v1383, 4
      %v1385 = vadd.f32 %v1383, %v1384
      %v1386 = vrot.slane %v1385, 2
      %v1387 = vadd.f32 %v1385, %v1386
      %v1388 = vrot.slane %v1387, 1
      %v1389 = vadd.f32 %v1387, %v1388
      %1390 = vst [vmem:[#allocation13] sm:$0x1] %v1389
    $region45: #{tpu_custom_call.1} parent=1 // pred_fallthru
      _
    // Predicated region
    $region46: #{tpu_custom_call.1} parent=1 // pred_check
      _
    $region47: #{tpu_custom_call.1} parent=1 // pred_check_branch
      %1392 = sbr.rel (0) target = $region49
    $region48: #{tpu_custom_call.1} parent=1 // pred_region
      %s1394 = ssub.s32 16, 16
      %1395 = vsyncadd [#allocation7], %s1394
      %s1397 = sshll.u32 [#allocation13], 4
      %s1398 = int_to_ptr.vmem [resolvable:$true] %s1397
      %1400 = dma.vmem_to_hbm [thread:$0]  %s1398, 16, %s6, [#allocation7]
    $region49: #{tpu_custom_call.1} parent=1 // pred_fallthru
      _
    // Predicated region
    $region50: #{tpu_custom_call.1} parent=1 // pred_check
      _
    $region51: #{tpu_custom_call.1} parent=1 // pred_check_branch
      %1402 = sbr.rel (0) target = $region53
    $region52: #{tpu_custom_call.1} parent=1 // pred_region
      %1403 = dma.done [#allocation7], 16
    $region53: #{tpu_custom_call.1} parent=1 // pred_fallthru
      _
    %1404 = vsyncpa [#allocation6], 1
    %1405 = vsyncpa [#allocation9], 1
    %1406 = vsyncpa [#allocation12], 1
    %1407 = vsyncpa [#allocation7], 1

</llo_original>
